<compile_context>
chip_gen: v6e
topology: v6e:2x2x1
jax: 0.10.0
libtpu: 0.0.40
codegen_flags: <defaults>
</compile_context>

<pallas_src>
import jax
import jax.numpy as jnp
from jax.experimental import pallas as pl
from jax.experimental.pallas import tpu as pltpu


# ---------------------------------------------------------------------------
# Pallas kernel (generated for a static number of layers)
# ---------------------------------------------------------------------------
def _make_dense_kernel(num_layers):
    """Kernel args: x_ref, w_0, b_0, ..., w_{L-1}, b_{L-1}, o_ref."""

    def kernel(x_ref, *refs):
        o_ref = refs[-1]
        h = x_ref[...]                                    # bf16 (TILE_M, dim_in)
        for l in range(num_layers):                       # static unroll
            w = refs[2 * l][...]                          # bf16 (K_l, D_l)
            b = refs[2 * l + 1][...]                      # f32  (1,  D_l)
            acc = jnp.dot(h, w, preferred_element_type=jnp.float32)   # MXU, f32 acc
            acc = jnp.maximum(acc + b, 0.0)               # bias + ReLU in f32 (VPU)
            h = acc if l + 1 == num_layers else acc.astype(jnp.bfloat16)
        o_ref[...] = h.astype(o_ref.dtype)

    return kernel


# ---------------------------------------------------------------------------
# Wrapper: Flatten -> fused MLP kernel -> Unflatten
# ---------------------------------------------------------------------------
def dense_forward(X, params, *, tile_m=8):
    """Dense.forward.

    X: (N, ...) float32.
    params: list of (w, b); w: (in_dim, out_dim) f32, b: (out_dim,) f32.
    Returns (N, out_dim_last, 1, 1) float32.
    """
    N = X.shape[0]
    dim_in = 1
    for s in X.shape[1:]:
        dim_in *= s
    x = X.reshape(N, dim_in).astype(jnp.float32)          # Flatten

    # Pad batch up to a multiple of the sublane-aligned tile.
    m_pad = -(-N // tile_m) * tile_m
    if m_pad != N:
        x = jnp.pad(x, ((0, m_pad - N), (0, 0)))
    x = x.astype(jnp.bfloat16)                            # bf16 MXU inputs

    num_layers = len(params)
    dim_out = params[-1][0].shape[1]

    inputs = [x]
    in_specs = [pl.BlockSpec((tile_m, dim_in), lambda i: (i, 0))]
    for w, b in params:
        k, d = w.shape
        inputs.append(w.astype(jnp.bfloat16))
        inputs.append(b.reshape(1, d).astype(jnp.float32))
        in_specs.append(pl.BlockSpec((k, d), lambda i: (0, 0)))   # VMEM-resident
        in_specs.append(pl.BlockSpec((1, d), lambda i: (0, 0)))   # VMEM-resident
    out_spec = pl.BlockSpec((tile_m, dim_out), lambda i: (i, 0))

    grid = (m_pad // tile_m,)

    # Rough VMEM / cost bookkeeping for the compiler.
    weight_bytes = sum(w.size * 2 + w.shape[1] * 4 for w, _ in params)
    max_d = max(max(w.shape) for w, _ in params)
    io_tile_bytes = 2 * (tile_m * dim_in * 2 + tile_m * dim_out * 4)   # dbl-buffered
    act_bytes = 2 * tile_m * max_d * 4
    vmem_limit = int(min(max(4 * (weight_bytes + io_tile_bytes + act_bytes),
                             16 << 20), 32 << 20))
    flops = 2 * m_pad * sum(w.shape[0] * w.shape[1] for w, _ in params)
    bytes_accessed = x.size * 2 + weight_bytes + m_pad * dim_out * 4

    out = pl.pallas_call(
        _make_dense_kernel(num_layers),
        out_shape=jax.ShapeDtypeStruct((m_pad, dim_out), jnp.float32),
        grid=grid,
        in_specs=in_specs,
        out_specs=out_spec,
        compiler_params=pltpu.CompilerParams(
            dimension_semantics=("parallel",),
            vmem_limit_bytes=vmem_limit),
        cost_estimate=pl.CostEstimate(
            flops=flops, transcendentals=0, bytes_accessed=bytes_accessed),
    )(*inputs)

    out = out[:N]
    return out.reshape(N, dim_out, 1, 1)                  # Unflatten


# ---------------------------------------------------------------------------
# Parameter construction (matches Dense: dims = layer_dims + [dim_in])
# ---------------------------------------------------------------------------
def make_dense_params(key, layer_dims, dim_in):
    dims = list(layer_dims) + [dim_in]
    params = []
    prev = dim_in
    for d in dims:
        key, kw, kb = jax.random.split(key, 3)
        w = jax.random.normal(kw, (prev, d), jnp.float32) / (float(prev) ** 0.5)
        b = 0.01 * jax.random.normal(kb, (d,), jnp.float32)
        params.append((w, b))
        prev = d
    return params


# ---------------------------------------------------------------------------
# Pure-JAX f32 reference (for correctness check)
# ---------------------------------------------------------------------------
def _ref_forward(X, params):
    N = X.shape[0]
    h = X.reshape(N, -1)
    for w, b in params:
        h = jnp.maximum(h @ w + b, 0.0)
    return h.reshape(N, -1, 1, 1)


# ---------------------------------------------------------------------------
if __name__ == "__main__":
    key = jax.random.PRNGKey(0)
    kx, kp = jax.random.split(key)

    # Small shapes consistent with the module: X (N, C, H, W) -> dim_in = C*H*W.
    N, C, H, W = 16, 4, 16, 16
    dim_in = C * H * W                       # 1024
    layer_dims = [512, 128]                  # lane-friendly hidden widths

    X = jax.random.normal(kx, (N, C, H, W), jnp.float32)
    params = make_dense_params(kp, layer_dims, dim_in)

    fwd = jax.jit(lambda x: dense_forward(x, params))
    out = jax.block_until_ready(fwd(X))

    ref = _ref_forward(X, params)
    assert out.shape == ref.shape == (N, dim_in, 1, 1)
    # bf16 MXU inputs (f32 accumulation) -> compare with a relaxed tolerance.
    rel_err = float(jnp.max(jnp.abs(out - ref)) / (jnp.max(jnp.abs(ref)) + 1e-6))
    assert rel_err < 5e-2, f"mismatch vs f32 reference: rel max err {rel_err}"

    print("KERNEL_OK")
</pallas_src>

<mosaic_0001>
module attributes {stable_mosaic.version = 11 : i64} {
  func.func @kernel(%arg0: i32, %arg1: memref<8x1024xbf16, #tpu.memory_space<vmem>>, %arg2: memref<1024x512xbf16, #tpu.memory_space<vmem>>, %arg3: memref<1x512xf32, #tpu.memory_space<vmem>>, %arg4: memref<512x128xbf16, #tpu.memory_space<vmem>>, %arg5: memref<1x128xf32, #tpu.memory_space<vmem>>, %arg6: memref<128x1024xbf16, #tpu.memory_space<vmem>>, %arg7: memref<1x1024xf32, #tpu.memory_space<vmem>>, %arg8: memref<8x1024xf32, #tpu.memory_space<vmem>>) attributes {dimension_semantics = [#tpu.dimension_semantics<parallel>], iteration_bounds = array<i64: 2>, scalar_prefetch = 0 : i64, scratch_operands = 0 : i64, tpu.core_type = #tpu.core_type<tc>, window_params = [{transform_indices = @transform_0, window_bounds = array<i64: 8, 1024>}, {pipeline_mode = #tpu.pipeline_mode<synchronous>, transform_indices = @transform_1, window_bounds = array<i64: 1024, 512>}, {pipeline_mode = #tpu.pipeline_mode<synchronous>, transform_indices = @transform_2, window_bounds = array<i64: 1, 512>}, {pipeline_mode = #tpu.pipeline_mode<synchronous>, transform_indices = @transform_3, window_bounds = array<i64: 512, 128>}, {pipeline_mode = #tpu.pipeline_mode<synchronous>, transform_indices = @transform_4, window_bounds = array<i64: 1, 128>}, {pipeline_mode = #tpu.pipeline_mode<synchronous>, transform_indices = @transform_5, window_bounds = array<i64: 128, 1024>}, {pipeline_mode = #tpu.pipeline_mode<synchronous>, transform_indices = @transform_6, window_bounds = array<i64: 1, 1024>}, {transform_indices = @transform_7, window_bounds = array<i64: 8, 1024>}]} {
    %c0 = arith.constant 0 : index
    %c0_0 = arith.constant 0 : index
    %0 = vector.load %arg1[%c0, %c0_0] : memref<8x1024xbf16, #tpu.memory_space<vmem>>, vector<8x1024xbf16>
    %c0_1 = arith.constant 0 : index
    %c0_2 = arith.constant 0 : index
    %1 = vector.load %arg2[%c0_1, %c0_2] : memref<1024x512xbf16, #tpu.memory_space<vmem>>, vector<1024x512xbf16>
    %c0_3 = arith.constant 0 : index
    %c0_4 = arith.constant 0 : index
    %2 = vector.load %arg3[%c0_3, %c0_4] : memref<1x512xf32, #tpu.memory_space<vmem>>, vector<1x512xf32>
    %cst = arith.constant dense<0.000000e+00> : vector<8x512xf32>
    %3 = tpu.matmul %0, %1, %cst {dimension_numbers = #tpu.dot_dimension_numbers<[1], [0], [0], [1], [0, 0, 1, 1], [], []>} : vector<8x1024xbf16>, vector<1024x512xbf16>, vector<8x512xf32> -> vector<8x512xf32>
    %4 = vector.broadcast %2 : vector<1x512xf32> to vector<8x512xf32>
    %5 = arith.addf %3, %4 : vector<8x512xf32>
    %cst_5 = arith.constant 0.000000e+00 : f32
    %6 = vector.broadcast %cst_5 : f32 to vector<8x512xf32>
    %7 = arith.maximumf %5, %6 : vector<8x512xf32>
    %8 = arith.truncf %7 : vector<8x512xf32> to vector<8x512xbf16>
    %c0_6 = arith.constant 0 : index
    %c0_7 = arith.constant 0 : index
    %9 = vector.load %arg4[%c0_6, %c0_7] : memref<512x128xbf16, #tpu.memory_space<vmem>>, vector<512x128xbf16>
    %c0_8 = arith.constant 0 : index
    %c0_9 = arith.constant 0 : index
    %10 = vector.load %arg5[%c0_8, %c0_9] : memref<1x128xf32, #tpu.memory_space<vmem>>, vector<1x128xf32>
    %cst_10 = arith.constant dense<0.000000e+00> : vector<8x128xf32>
    %11 = tpu.matmul %8, %9, %cst_10 {dimension_numbers = #tpu.dot_dimension_numbers<[1], [0], [0], [1], [0, 0, 1, 1], [], []>} : vector<8x512xbf16>, vector<512x128xbf16>, vector<8x128xf32> -> vector<8x128xf32>
    %12 = vector.broadcast %10 : vector<1x128xf32> to vector<8x128xf32>
    %13 = arith.addf %11, %12 : vector<8x128xf32>
    %cst_11 = arith.constant 0.000000e+00 : f32
    %14 = vector.broadcast %cst_11 : f32 to vector<8x128xf32>
    %15 = arith.maximumf %13, %14 : vector<8x128xf32>
    %16 = arith.truncf %15 : vector<8x128xf32> to vector<8x128xbf16>
    %c0_12 = arith.constant 0 : index
    %c0_13 = arith.constant 0 : index
    %17 = vector.load %arg6[%c0_12, %c0_13] : memref<128x1024xbf16, #tpu.memory_space<vmem>>, vector<128x1024xbf16>
    %c0_14 = arith.constant 0 : index
    %c0_15 = arith.constant 0 : index
    %18 = vector.load %arg7[%c0_14, %c0_15] : memref<1x1024xf32, #tpu.memory_space<vmem>>, vector<1x1024xf32>
    %cst_16 = arith.constant dense<0.000000e+00> : vector<8x1024xf32>
    %19 = tpu.matmul %16, %17, %cst_16 {dimension_numbers = #tpu.dot_dimension_numbers<[1], [0], [0], [1], [0, 0, 1, 1], [], []>} : vector<8x128xbf16>, vector<128x1024xbf16>, vector<8x1024xf32> -> vector<8x1024xf32>
    %20 = vector.broadcast %18 : vector<1x1024xf32> to vector<8x1024xf32>
    %21 = arith.addf %19, %20 : vector<8x1024xf32>
    %cst_17 = arith.constant 0.000000e+00 : f32
    %22 = vector.broadcast %cst_17 : f32 to vector<8x1024xf32>
    %23 = arith.maximumf %21, %22 : vector<8x1024xf32>
    %c0_18 = arith.constant 0 : index
    %c0_19 = arith.constant 0 : index
    %24 = vector.load %arg8[%c0_18, %c0_19] : memref<8x1024xf32, #tpu.memory_space<vmem>>, vector<8x1024xf32>
    tpu.vector_store %arg8[%c0_18, %c0_19], %23 {strides = array<i32>} : memref<8x1024xf32, #tpu.memory_space<vmem>>, vector<8x1024xf32>,
    return
  }
  func.func @transform_0(%arg0: i32) -> (i32, i32) {
    %c0_i32 = arith.constant 0 : i32
    %c0_i32_0 = arith.constant 0 : i32
    return %arg0, %c0_i32 : i32, i32
  }
  func.func @transform_1(%arg0: i32) -> (i32, i32) {
    %c0_i32 = arith.constant 0 : i32
    %c0_i32_0 = arith.constant 0 : i32
    %c0_i32_1 = arith.constant 0 : i32
    return %c0_i32, %c0_i32_0 : i32, i32
  }
  func.func @transform_2(%arg0: i32) -> (i32, i32) {
    %c0_i32 = arith.constant 0 : i32
    %c0_i32_0 = arith.constant 0 : i32
    %c0_i32_1 = arith.constant 0 : i32
    return %c0_i32, %c0_i32_0 : i32, i32
  }
  func.func @transform_3(%arg0: i32) -> (i32, i32) {
    %c0_i32 = arith.constant 0 : i32
    %c0_i32_0 = arith.constant 0 : i32
    %c0_i32_1 = arith.constant 0 : i32
    return %c0_i32, %c0_i32_0 : i32, i32
  }
  func.func @transform_4(%arg0: i32) -> (i32, i32) {
    %c0_i32 = arith.constant 0 : i32
    %c0_i32_0 = arith.constant 0 : i32
    %c0_i32_1 = arith.constant 0 : i32
    return %c0_i32, %c0_i32_0 : i32, i32
  }
  func.func @transform_5(%arg0: i32) -> (i32, i32) {
    %c0_i32 = arith.constant 0 : i32
    %c0_i32_0 = arith.constant 0 : i32
    %c0_i32_1 = arith.constant 0 : i32
    return %c0_i32, %c0_i32_0 : i32, i32
  }
  func.func @transform_6(%arg0: i32) -> (i32, i32) {
    %c0_i32 = arith.constant 0 : i32
    %c0_i32_0 = arith.constant 0 : i32
    %c0_i32_1 = arith.constant 0 : i32
    return %c0_i32, %c0_i32_0 : i32, i32
  }
  func.func @transform_7(%arg0: i32) -> (i32, i32) {
    %c0_i32 = arith.constant 0 : i32
    %c0_i32_0 = arith.constant 0 : i32
    return %arg0, %c0_i32 : i32, i32
  }
}

</mosaic_0001>

<llo_original>
// kernel: _lambda_.1
$region0: #{_lambda_.1}
  #allocation0 [shape = 'u32[]', space=smem, size = 0x4, offset = 0x4, fixed_abs, tag = 'smem constant byte address 0x4 - core index']
  #allocation1 [shape = 'u32[144,128]{1,0:T(1,128)}', space=vmem, size = 0x12000, scoped, tag = 'internal scratch']
  %s0 = inlined_call_operand.vmem [shape: bf16[16,1024], index: 0, kind: input, shape index: {}]
  %s1 = inlined_call_operand.vmem [shape: bf16[1024,512], index: 1, kind: input, shape index: {}]
  %s2 = inlined_call_operand.vmem [shape: f32[1,512], index: 2, kind: input, shape index: {}]
  %s3 = inlined_call_operand.hbm [shape: bf16[512,128], index: 3, kind: input, shape index: {}]
  %s4 = inlined_call_operand.vmem [shape: f32[1,128], index: 4, kind: input, shape index: {}]
  %s5 = inlined_call_operand.hbm [shape: bf16[128,1024], index: 5, kind: input, shape index: {}]
  %s6 = inlined_call_operand.vmem [shape: f32[1,1024], index: 6, kind: input, shape index: {}]
  %s7 = inlined_call_operand.vmem [shape: f32[16,1024], index: 7, kind: output, shape index: {}]
  %s8 = sld [smem:[#allocation0]]
  $region69: #{_lambda_.1} parent=0
    _
  %s10 = ssub.s32 1, %s8
  %s11 = scalar_select 0, %s10, %s8
  $region1: #{_lambda_.1} parent=0
    #allocation2 [shape = 'u8[131072]{0}', space=vmem, size = 0x20000, scoped, tag = 'input window, operand 3, single buffered']
    #allocation3 [shape = 's32[2]{0}', space=sflag, size = 0x8, scoped, tag = 'scoped memory for _lambda_.1']
    #allocation4 [shape = 'u8[262144]{0}', space=vmem, size = 0x40000, scoped, tag = 'input window, operand 5, single buffered']
    #allocation5 [shape = 's32[1]{0}', space=sflag, size = 0x4, scoped, tag = 'scoped memory for _lambda_.1']
    %12 = vsyncpa [#allocation3], 0
    %13 = vsyncpa [#allocation5], 0
    loop: start=0, step=1, limit=4
    $region2: #{_lambda_.1} parent=1 // loop_pre_header
      _
    $region3: #{_lambda_.1} parent=1 // loop_header
      %s15 = sphi 0, %s19
      %p16 = scmp.ge.s32.totalorder %s15, 4
      %s25 = sphi 0, %s27
      %s28 = sphi 0, %s25
      %s29 = sphi 0, %s28
      %s45 = sphi 0, %s29
      %s49 = sphi 0, %s49
      %s51 = sphi 0, %s49
      %s52 = sphi 0, %s51
      %s66 = sphi 0, %s52
      %s70 = sphi 0, %s70
      %s72 = sphi 0, %s70
      %s73 = sphi 0, %s72
      %s87 = sphi 0, %s73
      %s91 = sphi 0, %s91
      %s93 = sphi 0, %s91
      %s94 = sphi 0, %s93
      %s108 = sphi 0, %s94
      %s112 = sphi 0, %s112
      %s114 = sphi 0, %s112
      %s115 = sphi 0, %s114
      %s129 = sphi 0, %s115
      %s133 = sphi 0, %s133
      %s135 = sphi 0, %s133
      %s136 = sphi 0, %s135
      %s150 = sphi 0, %s136
      %s154 = sphi 0, %s154
      %s156 = sphi 0, %s154
      %s157 = sphi 0, %s156
      %s171 = sphi 0, %s157
      %s177 = sphi 0, %s179
      %s180 = sphi 0, %s177
      %s181 = sphi 0, %s180
      %s197 = sphi 0, %s181
    $region4: #{_lambda_.1} parent=1 // loop_header_branch
      %18 = sbr.rel (%p16) target = $region8
    $region5: #{_lambda_.1} parent=1 // loop_body
      %s20 = ssub.s32 %s15, 1
      %s21 = ssub.s32 %s15, 2
      %s22 = sadd.s32 %s15, 1
      %s23 = ssub.s32 %s15, %s22
      %p24 = scmp.eq.s32.totalorder %s23, 0
      %s26 = sadd.s32 %s25, 1
      %s27 = scalar_select %p24, %s25, %s26
      %p30 = pneg %p24
      %p31 = scmp.eq.s32.totalorder %s15, 1
      %p32 = por %p30, %p31
      %p33 = scmp.ne.s32.totalorder %s25, %s28
      %p34 = scmp.eq.s32.totalorder %s15, 0
      %p35 = por %p33, %p34
      %p36 = scmp.ne.s32.totalorder %s25, %s28
      %p37 = scmp.eq.s32.totalorder %s20, 1
      %p38 = por %p36, %p37
      %p39 = scmp.ne.s32.totalorder %s28, %s29
      %p40 = scmp.eq.s32.totalorder %s20, 0
      %p41 = por %p39, %p40
      %p42 = scmp.ne.s32.totalorder %s28, %s29
      %p43 = scmp.eq.s32.totalorder %s21, 1
      %p44 = por %p42, %p43
      %p46 = scmp.ne.s32.totalorder %s29, %s45
      %p47 = scmp.eq.s32.totalorder %s21, 0
      %p48 = por %p46, %p47
      %s50 = sadd.s32 %s49, 1
      %p53 = scmp.eq.s32.totalorder %s15, 1
      %p54 = scmp.ne.s32.totalorder %s49, %s51
      %p55 = scmp.eq.s32.totalorder %s15, 0
      %p56 = por %p54, %p55
      %p57 = scmp.ne.s32.totalorder %s49, %s51
      %p58 = scmp.eq.s32.totalorder %s20, 1
      %p59 = por %p57, %p58
      %p60 = scmp.ne.s32.totalorder %s51, %s52
      %p61 = scmp.eq.s32.totalorder %s20, 0
      %p62 = por %p60, %p61
      %p63 = scmp.ne.s32.totalorder %s51, %s52
      %p64 = scmp.eq.s32.totalorder %s21, 1
      %p65 = por %p63, %p64
      %p67 = scmp.ne.s32.totalorder %s52, %s66
      %p68 = scmp.eq.s32.totalorder %s21, 0
      %p69 = por %p67, %p68
      %s71 = sadd.s32 %s70, 1
      %p74 = scmp.eq.s32.totalorder %s15, 1
      %p75 = scmp.ne.s32.totalorder %s70, %s72
      %p76 = scmp.eq.s32.totalorder %s15, 0
      %p77 = por %p75, %p76
      %p78 = scmp.ne.s32.totalorder %s70, %s72
      %p79 = scmp.eq.s32.totalorder %s20, 1
      %p80 = por %p78, %p79
      %p81 = scmp.ne.s32.totalorder %s72, %s73
      %p82 = scmp.eq.s32.totalorder %s20, 0
      %p83 = por %p81, %p82
      %p84 = scmp.ne.s32.totalorder %s72, %s73
      %p85 = scmp.eq.s32.totalorder %s21, 1
      %p86 = por %p84, %p85
      %p88 = scmp.ne.s32.totalorder %s73, %s87
      %p89 = scmp.eq.s32.totalorder %s21, 0
      %p90 = por %p88, %p89
      %s92 = sadd.s32 %s91, 1
      %p95 = scmp.eq.s32.totalorder %s15, 1
      %p96 = scmp.ne.s32.totalorder %s91, %s93
      %p97 = scmp.eq.s32.totalorder %s15, 0
      %p98 = por %p96, %p97
      %p99 = scmp.ne.s32.totalorder %s91, %s93
      %p100 = scmp.eq.s32.totalorder %s20, 1
      %p101 = por %p99, %p100
      %p102 = scmp.ne.s32.totalorder %s93, %s94
      %p103 = scmp.eq.s32.totalorder %s20, 0
      %p104 = por %p102, %p103
      %p105 = scmp.ne.s32.totalorder %s93, %s94
      %p106 = scmp.eq.s32.totalorder %s21, 1
      %p107 = por %p105, %p106
      %p109 = scmp.ne.s32.totalorder %s94, %s108
      %p110 = scmp.eq.s32.totalorder %s21, 0
      %p111 = por %p109, %p110
      %s113 = sadd.s32 %s112, 1
      %p116 = scmp.eq.s32.totalorder %s15, 1
      %p117 = scmp.ne.s32.totalorder %s112, %s114
      %p118 = scmp.eq.s32.totalorder %s15, 0
      %p119 = por %p117, %p118
      %p120 = scmp.ne.s32.totalorder %s112, %s114
      %p121 = scmp.eq.s32.totalorder %s20, 1
      %p122 = por %p120, %p121
      %p123 = scmp.ne.s32.totalorder %s114, %s115
      %p124 = scmp.eq.s32.totalorder %s20, 0
      %p125 = por %p123, %p124
      %p126 = scmp.ne.s32.totalorder %s114, %s115
      %p127 = scmp.eq.s32.totalorder %s21, 1
      %p128 = por %p126, %p127
      %p130 = scmp.ne.s32.totalorder %s115, %s129
      %p131 = scmp.eq.s32.totalorder %s21, 0
      %p132 = por %p130, %p131
      %s134 = sadd.s32 %s133, 1
      %p137 = scmp.eq.s32.totalorder %s15, 1
      %p138 = scmp.ne.s32.totalorder %s133, %s135
      %p139 = scmp.eq.s32.totalorder %s15, 0
      %p140 = por %p138, %p139
      %p141 = scmp.ne.s32.totalorder %s133, %s135
      %p142 = scmp.eq.s32.totalorder %s20, 1
      %p143 = por %p141, %p142
      %p144 = scmp.ne.s32.totalorder %s135, %s136
      %p145 = scmp.eq.s32.totalorder %s20, 0
      %p146 = por %p144, %p145
      %p147 = scmp.ne.s32.totalorder %s135, %s136
      %p148 = scmp.eq.s32.totalorder %s21, 1
      %p149 = por %p147, %p148
      %p151 = scmp.ne.s32.totalorder %s136, %s150
      %p152 = scmp.eq.s32.totalorder %s21, 0
      %p153 = por %p151, %p152
      %s155 = sadd.s32 %s154, 1
      %p158 = scmp.eq.s32.totalorder %s15, 1
      %p159 = scmp.ne.s32.totalorder %s154, %s156
      %p160 = scmp.eq.s32.totalorder %s15, 0
      %p161 = por %p159, %p160
      %p162 = scmp.ne.s32.totalorder %s154, %s156
      %p163 = scmp.eq.s32.totalorder %s20, 1
      %p164 = por %p162, %p163
      %p165 = scmp.ne.s32.totalorder %s156, %s157
      %p166 = scmp.eq.s32.totalorder %s20, 0
      %p167 = por %p165, %p166
      %p168 = scmp.ne.s32.totalorder %s156, %s157
      %p169 = scmp.eq.s32.totalorder %s21, 1
      %p170 = por %p168, %p169
      %p172 = scmp.ne.s32.totalorder %s157, %s171
      %p173 = scmp.eq.s32.totalorder %s21, 0
      %p174 = por %p172, %p173
      %s175 = ssub.s32 %s15, %s22
      %p176 = scmp.eq.s32.totalorder %s175, 0
      %s178 = sadd.s32 %s177, 1
      %s179 = scalar_select %p176, %s177, %s178
      %p182 = pneg %p176
      %p183 = scmp.eq.s32.totalorder %s15, 1
      %p184 = por %p182, %p183
      %p185 = scmp.ne.s32.totalorder %s177, %s180
      %p186 = scmp.eq.s32.totalorder %s15, 0
      %p187 = por %p185, %p186
      %p188 = scmp.ne.s32.totalorder %s177, %s180
      %p189 = scmp.eq.s32.totalorder %s20, 1
      %p190 = por %p188, %p189
      %p191 = scmp.ne.s32.totalorder %s180, %s181
      %p192 = scmp.eq.s32.totalorder %s20, 0
      %p193 = por %p191, %p192
      %p194 = scmp.ne.s32.totalorder %s180, %s181
      %p195 = scmp.eq.s32.totalorder %s21, 1
      %p196 = por %p194, %p195
      %p198 = scmp.ne.s32.totalorder %s181, %s197
      %p199 = scmp.eq.s32.totalorder %s21, 0
      %p200 = por %p198, %p199
      %p201 = scmp.le.s32.totalorder 1, %s15
      %p202 = scmp.lt.s32.totalorder %s15, 3
      %p203 = pnand %p201, %p202
      %p204 = pneg %p203
      // Predicated region
      $region9: #{_lambda_.1} parent=5 // pred_check
        _
      $region10: #{_lambda_.1} parent=5 // pred_check_branch
        %206 = sbr.rel (%p203) target = $region12
      $region11: #{_lambda_.1} parent=5 // pred_region
        %s207 = ssub.s32 %s15, 1
        // Predicated region
        $region13: #{_lambda_.1} parent=11 // pred_check
          %p208 = pneg %p62
        $region14: #{_lambda_.1} parent=11 // pred_check_branch
          %210 = sbr.rel (%p208) target = $region16
        $region15: #{_lambda_.1} parent=11 // pred_region
          _
        $region16: #{_lambda_.1} parent=11 // pred_fallthru
          _
        // Predicated region
        $region17: #{_lambda_.1} parent=11 // pred_check
          %p211 = pneg %p83
        $region18: #{_lambda_.1} parent=11 // pred_check_branch
          %213 = sbr.rel (%p211) target = $region20
        $region19: #{_lambda_.1} parent=11 // pred_region
          _
        $region20: #{_lambda_.1} parent=11 // pred_fallthru
          _
        // Predicated region
        $region21: #{_lambda_.1} parent=11 // pred_check
          %p214 = pneg %p104
        $region22: #{_lambda_.1} parent=11 // pred_check_branch
          %216 = sbr.rel (%p214) target = $region24
        $region23: #{_lambda_.1} parent=11 // pred_region
          %s218 = ssub.s32 4096, 4096
          %219 = vsyncadd [#allocation3], %s218
          %s220 = sshll.u32 [#allocation2], 4
          %s221 = int_to_ptr.vmem [resolvable:$true] %s220
          %226 = dma.hbm_to_vmem [thread:$0]  %s3, 4096, %s221, [#allocation3], 64, 64, 4
        $region24: #{_lambda_.1} parent=11 // pred_fallthru
          _
        // Predicated region
        $region25: #{_lambda_.1} parent=11 // pred_check
          %p227 = pneg %p125
        $region26: #{_lambda_.1} parent=11 // pred_check_branch
          %229 = sbr.rel (%p227) target = $region28
        $region27: #{_lambda_.1} parent=11 // pred_region
          _
        $region28: #{_lambda_.1} parent=11 // pred_fallthru
          _
        // Predicated region
        $region29: #{_lambda_.1} parent=11 // pred_check
          %p230 = pneg %p146
        $region30: #{_lambda_.1} parent=11 // pred_check_branch
          %232 = sbr.rel (%p230) target = $region32
        $region31: #{_lambda_.1} parent=11 // pred_region
          %s234 = ssub.s32 8192, 8192
          %235 = vsyncadd [#allocation5], %s234
          %s236 = sshll.u32 [#allocation4], 4
          %s237 = int_to_ptr.vmem [resolvable:$true] %s236
          %242 = dma.hbm_to_vmem [thread:$0]  %s5, 8192, %s237, [#allocation5], 512, 512, 32
        $region32: #{_lambda_.1} parent=11 // pred_fallthru
          _
        // Predicated region
        $region33: #{_lambda_.1} parent=11 // pred_check
          %p243 = pneg %p167
        $region34: #{_lambda_.1} parent=11 // pred_check_branch
          %245 = sbr.rel (%p243) target = $region36
        $region35: #{_lambda_.1} parent=11 // pred_region
          _
        $region36: #{_lambda_.1} parent=11 // pred_fallthru
          _
      $region12: #{_lambda_.1} parent=5 // pred_fallthru
        _
      %p246 = scmp.lt.s32.totalorder %s15, 2
      // Predicated region
      $region37: #{_lambda_.1} parent=5 // pred_check
        %p247 = pneg %p246
      $region38: #{_lambda_.1} parent=5 // pred_check_branch
        %249 = sbr.rel (%p247) target = $region40
      $region39: #{_lambda_.1} parent=5 // pred_region
        // Predicated region
        $region41: #{_lambda_.1} parent=39 // pred_check
          %p250 = pneg %p35
        $region42: #{_lambda_.1} parent=39 // pred_check_branch
          %252 = sbr.rel (%p250) target = $region44
        $region43: #{_lambda_.1} parent=39 // pred_region
          %p253 = scmp.lt.s32.totalorder %s15, 1
          %s254 = scalar_select %p253, %s15, 1
          %s255 = smul.addr %s254, 8
          %s256 = smul.addr %s255, 4
          %s257 = scalar_lea.vmem %s0, %s256
        $region44: #{_lambda_.1} parent=39 // pred_fallthru
          _
      $region40: #{_lambda_.1} parent=5 // pred_fallthru
        _
      %p258 = scmp.le.s32.totalorder 1, %s15
      %p259 = scmp.lt.s32.totalorder %s15, 3
      %p260 = pnand %p258, %p259
      %p261 = pneg %p260
      // Predicated region
      $region45: #{_lambda_.1} parent=5 // pred_check
        _
      $region46: #{_lambda_.1} parent=5 // pred_check_branch
        %263 = sbr.rel (%p260) target = $region48
      $region47: #{_lambda_.1} parent=5 // pred_region
        %s264 = ssub.s32 %s15, 1
        // Predicated region
        $region49: #{_lambda_.1} parent=47 // pred_check
          %p265 = pneg %p104
        $region50: #{_lambda_.1} parent=47 // pred_check_branch
          %267 = sbr.rel (%p265) target = $region52
        $region51: #{_lambda_.1} parent=47 // pred_region
          %268 = dma.done [#allocation3], 4096
        $region52: #{_lambda_.1} parent=47 // pred_fallthru
          _
        // Predicated region
        $region53: #{_lambda_.1} parent=47 // pred_check
          %p269 = pneg %p146
        $region54: #{_lambda_.1} parent=47 // pred_check_branch
          %271 = sbr.rel (%p269) target = $region56
        $region55: #{_lambda_.1} parent=47 // pred_region
          %272 = dma.done [#allocation5], 8192
        $region56: #{_lambda_.1} parent=47 // pred_fallthru
          _
        %p273 = scmp.lt.s32.totalorder %s20, 1
        %s274 = scalar_select %p273, %s20, 1
        %s275 = smul.addr %s274, 8
        %s276 = smul.addr %s275, 4
        %s277 = scalar_lea.vmem %s0, %s276
        %p278 = pneg %p41
        %p279 = pneg %p38
        %p280 = pneg %p62
        %p281 = pneg %p59
        %p282 = pneg %p83
        %p283 = pneg %p80
        %p284 = pneg %p104
        %p285 = pneg %p101
        %p286 = pneg %p125
        %p287 = pneg %p122
        %p288 = pneg %p146
        %p289 = pneg %p143
        %p290 = pneg %p167
        %p291 = pneg %p164
        %p292 = pneg %p193
        %p293 = pneg %p190
        %p294 = scmp.lt.s32.totalorder %s20, 1
        %s295 = scalar_select %p294, %s20, 1
        %s296 = smul.addr %s295, 8
        %s297 = smul.addr %s296, 8
        %s298 = scalar_lea.vmem %s7, %s297
        %p299 = scmp.lt.s32.totalorder %s20, 1
        %s300 = scalar_select %p299, %s20, 1
        %s301 = smul.addr %s300, 8
        %s302 = smul.addr %s301, 4
        %s303 = scalar_lea.vmem %s0, %s302
        %p304 = scmp.lt.s32.totalorder %s20, 1
        %s305 = scalar_select %p304, %s20, 1
        %s306 = smul.addr %s305, 8
        %s307 = smul.addr %s306, 8
        %s308 = scalar_lea.vmem %s7, %s307
        %v310 = vld [vmem:[%s303] sm:$0xff]
        %v311 = vld [vmem:[%s303 + $0x8] sm:$0xff]
        %v312 = vld [vmem:[%s303 + $0x10] sm:$0xff]
        %v313 = vld [vmem:[%s303 + $0x18] sm:$0xff]
        %v314 = vld [vmem:[%s1] sm:$0xff]
        %v315 = vld [vmem:[%s1 + $0x8] sm:$0xff]
        %v316 = vld [vmem:[%s1 + $0x10] sm:$0xff]
        %v317 = vld [vmem:[%s1 + $0x18] sm:$0xff]
        %v318 = vld [vmem:[%s1 + $0x20] sm:$0xff]
        %v319 = vld [vmem:[%s1 + $0x28] sm:$0xff]
        %v320 = vld [vmem:[%s1 + $0x30] sm:$0xff]
        %v321 = vld [vmem:[%s1 + $0x38] sm:$0xff]
        %v322 = vld [vmem:[%s1 + $0x40] sm:$0xff]
        %v323 = vld [vmem:[%s1 + $0x48] sm:$0xff]
        %v324 = vld [vmem:[%s1 + $0x50] sm:$0xff]
        %v325 = vld [vmem:[%s1 + $0x58] sm:$0xff]
        %v326 = vld [vmem:[%s1 + $0x60] sm:$0xff]
        %v327 = vld [vmem:[%s1 + $0x68] sm:$0xff]
        %v328 = vld [vmem:[%s1 + $0x70] sm:$0xff]
        %v329 = vld [vmem:[%s1 + $0x78] sm:$0xff]
        %v330 = vld [vmem:[%s1 + $0x80] sm:$0xff]
        %v331 = vld [vmem:[%s1 + $0x88] sm:$0xff]
        %v332 = vld [vmem:[%s1 + $0x90] sm:$0xff]
        %v333 = vld [vmem:[%s1 + $0x98] sm:$0xff]
        %v334 = vld [vmem:[%s1 + $0xa0] sm:$0xff]
        %v335 = vld [vmem:[%s1 + $0xa8] sm:$0xff]
        %v336 = vld [vmem:[%s1 + $0xb0] sm:$0xff]
        %v337 = vld [vmem:[%s1 + $0xb8] sm:$0xff]
        %v338 = vld [vmem:[%s1 + $0xc0] sm:$0xff]
        %v339 = vld [vmem:[%s1 + $0xc8] sm:$0xff]
        %v340 = vld [vmem:[%s1 + $0xd0] sm:$0xff]
        %v341 = vld [vmem:[%s1 + $0xd8] sm:$0xff]
        %v342 = vld [vmem:[%s1 + $0xe0] sm:$0xff]
        %v343 = vld [vmem:[%s1 + $0xe8] sm:$0xff]
        %v344 = vld [vmem:[%s1 + $0xf0] sm:$0xff]
        %v345 = vld [vmem:[%s1 + $0xf8] sm:$0xff]
        %v346 = vld [vmem:[%s1 + $0x100] sm:$0xff]
        %v347 = vld [vmem:[%s1 + $0x108] sm:$0xff]
        %v348 = vld [vmem:[%s1 + $0x110] sm:$0xff]
        %v349 = vld [vmem:[%s1 + $0x118] sm:$0xff]
        %v350 = vld [vmem:[%s1 + $0x120] sm:$0xff]
        %v351 = vld [vmem:[%s1 + $0x128] sm:$0xff]
        %v352 = vld [vmem:[%s1 + $0x130] sm:$0xff]
        %v353 = vld [vmem:[%s1 + $0x138] sm:$0xff]
        %v354 = vld [vmem:[%s1 + $0x140] sm:$0xff]
        %v355 = vld [vmem:[%s1 + $0x148] sm:$0xff]
        %v356 = vld [vmem:[%s1 + $0x150] sm:$0xff]
        %v357 = vld [vmem:[%s1 + $0x158] sm:$0xff]
        %v358 = vld [vmem:[%s1 + $0x160] sm:$0xff]
        %v359 = vld [vmem:[%s1 + $0x168] sm:$0xff]
        %v360 = vld [vmem:[%s1 + $0x170] sm:$0xff]
        %v361 = vld [vmem:[%s1 + $0x178] sm:$0xff]
        %v362 = vld [vmem:[%s1 + $0x180] sm:$0xff]
        %v363 = vld [vmem:[%s1 + $0x188] sm:$0xff]
        %v364 = vld [vmem:[%s1 + $0x190] sm:$0xff]
        %v365 = vld [vmem:[%s1 + $0x198] sm:$0xff]
        %v366 = vld [vmem:[%s1 + $0x1a0] sm:$0xff]
        %v367 = vld [vmem:[%s1 + $0x1a8] sm:$0xff]
        %v368 = vld [vmem:[%s1 + $0x1b0] sm:$0xff]
        %v369 = vld [vmem:[%s1 + $0x1b8] sm:$0xff]
        %v370 = vld [vmem:[%s1 + $0x1c0] sm:$0xff]
        %v371 = vld [vmem:[%s1 + $0x1c8] sm:$0xff]
        %v372 = vld [vmem:[%s1 + $0x1d0] sm:$0xff]
        %v373 = vld [vmem:[%s1 + $0x1d8] sm:$0xff]
        %v374 = vld [vmem:[%s1 + $0x1e0] sm:$0xff]
        %v375 = vld [vmem:[%s1 + $0x1e8] sm:$0xff]
        %v376 = vld [vmem:[%s1 + $0x1f0] sm:$0xff]
        %v377 = vld [vmem:[%s1 + $0x1f8] sm:$0xff]
        %v378 = vld [vmem:[%s1 + $0x200] sm:$0xff]
        %v379 = vld [vmem:[%s1 + $0x208] sm:$0xff]
        %v380 = vld [vmem:[%s1 + $0x210] sm:$0xff]
        %v381 = vld [vmem:[%s1 + $0x218] sm:$0xff]
        %v382 = vld [vmem:[%s1 + $0x220] sm:$0xff]
        %v383 = vld [vmem:[%s1 + $0x228] sm:$0xff]
        %v384 = vld [vmem:[%s1 + $0x230] sm:$0xff]
        %v385 = vld [vmem:[%s1 + $0x238] sm:$0xff]
        %v386 = vld [vmem:[%s1 + $0x240] sm:$0xff]
        %v387 = vld [vmem:[%s1 + $0x248] sm:$0xff]
        %v388 = vld [vmem:[%s1 + $0x250] sm:$0xff]
        %v389 = vld [vmem:[%s1 + $0x258] sm:$0xff]
        %v390 = vld [vmem:[%s1 + $0x260] sm:$0xff]
        %v391 = vld [vmem:[%s1 + $0x268] sm:$0xff]
        %v392 = vld [vmem:[%s1 + $0x270] sm:$0xff]
        %v393 = vld [vmem:[%s1 + $0x278] sm:$0xff]
        %v394 = vld [vmem:[%s1 + $0x280] sm:$0xff]
        %v395 = vld [vmem:[%s1 + $0x288] sm:$0xff]
        %v396 = vld [vmem:[%s1 + $0x290] sm:$0xff]
        %v397 = vld [vmem:[%s1 + $0x298] sm:$0xff]
        %v398 = vld [vmem:[%s1 + $0x2a0] sm:$0xff]
        %v399 = vld [vmem:[%s1 + $0x2a8] sm:$0xff]
        %v400 = vld [vmem:[%s1 + $0x2b0] sm:$0xff]
        %v401 = vld [vmem:[%s1 + $0x2b8] sm:$0xff]
        %v402 = vld [vmem:[%s1 + $0x2c0] sm:$0xff]
        %v403 = vld [vmem:[%s1 + $0x2c8] sm:$0xff]
        %v404 = vld [vmem:[%s1 + $0x2d0] sm:$0xff]
        %v405 = vld [vmem:[%s1 + $0x2d8] sm:$0xff]
        %v406 = vld [vmem:[%s1 + $0x2e0] sm:$0xff]
        %v407 = vld [vmem:[%s1 + $0x2e8] sm:$0xff]
        %v408 = vld [vmem:[%s1 + $0x2f0] sm:$0xff]
        %v409 = vld [vmem:[%s1 + $0x2f8] sm:$0xff]
        %v410 = vld [vmem:[%s1 + $0x300] sm:$0xff]
        %v411 = vld [vmem:[%s1 + $0x308] sm:$0xff]
        %v412 = vld [vmem:[%s1 + $0x310] sm:$0xff]
        %v413 = vld [vmem:[%s1 + $0x318] sm:$0xff]
        %v414 = vld [vmem:[%s1 + $0x320] sm:$0xff]
        %v415 = vld [vmem:[%s1 + $0x328] sm:$0xff]
        %v416 = vld [vmem:[%s1 + $0x330] sm:$0xff]
        %v417 = vld [vmem:[%s1 + $0x338] sm:$0xff]
        %v418 = vld [vmem:[%s1 + $0x340] sm:$0xff]
        %v419 = vld [vmem:[%s1 + $0x348] sm:$0xff]
        %v420 = vld [vmem:[%s1 + $0x350] sm:$0xff]
        %v421 = vld [vmem:[%s1 + $0x358] sm:$0xff]
        %v422 = vld [vmem:[%s1 + $0x360] sm:$0xff]
        %v423 = vld [vmem:[%s1 + $0x368] sm:$0xff]
        %v424 = vld [vmem:[%s1 + $0x370] sm:$0xff]
        %v425 = vld [vmem:[%s1 + $0x378] sm:$0xff]
        %v426 = vld [vmem:[%s1 + $0x380] sm:$0xff]
        %v427 = vld [vmem:[%s1 + $0x388] sm:$0xff]
        %v428 = vld [vmem:[%s1 + $0x390] sm:$0xff]
        %v429 = vld [vmem:[%s1 + $0x398] sm:$0xff]
        %v430 = vld [vmem:[%s1 + $0x3a0] sm:$0xff]
        %v431 = vld [vmem:[%s1 + $0x3a8] sm:$0xff]
        %v432 = vld [vmem:[%s1 + $0x3b0] sm:$0xff]
        %v433 = vld [vmem:[%s1 + $0x3b8] sm:$0xff]
        %v434 = vld [vmem:[%s1 + $0x3c0] sm:$0xff]
        %v435 = vld [vmem:[%s1 + $0x3c8] sm:$0xff]
        %v436 = vld [vmem:[%s1 + $0x3d0] sm:$0xff]
        %v437 = vld [vmem:[%s1 + $0x3d8] sm:$0xff]
        %v438 = vld [vmem:[%s1 + $0x3e0] sm:$0xff]
        %v439 = vld [vmem:[%s1 + $0x3e8] sm:$0xff]
        %v440 = vld [vmem:[%s1 + $0x3f0] sm:$0xff]
        %v441 = vld [vmem:[%s1 + $0x3f8] sm:$0xff]
        %v442 = vld [vmem:[%s1 + $0x400] sm:$0xff]
        %v443 = vld [vmem:[%s1 + $0x408] sm:$0xff]
        %v444 = vld [vmem:[%s1 + $0x410] sm:$0xff]
        %v445 = vld [vmem:[%s1 + $0x418] sm:$0xff]
        %v446 = vld [vmem:[%s1 + $0x420] sm:$0xff]
        %v447 = vld [vmem:[%s1 + $0x428] sm:$0xff]
        %v448 = vld [vmem:[%s1 + $0x430] sm:$0xff]
        %v449 = vld [vmem:[%s1 + $0x438] sm:$0xff]
        %v450 = vld [vmem:[%s1 + $0x440] sm:$0xff]
        %v451 = vld [vmem:[%s1 + $0x448] sm:$0xff]
        %v452 = vld [vmem:[%s1 + $0x450] sm:$0xff]
        %v453 = vld [vmem:[%s1 + $0x458] sm:$0xff]
        %v454 = vld [vmem:[%s1 + $0x460] sm:$0xff]
        %v455 = vld [vmem:[%s1 + $0x468] sm:$0xff]
        %v456 = vld [vmem:[%s1 + $0x470] sm:$0xff]
        %v457 = vld [vmem:[%s1 + $0x478] sm:$0xff]
        %v458 = vld [vmem:[%s1 + $0x480] sm:$0xff]
        %v459 = vld [vmem:[%s1 + $0x488] sm:$0xff]
        %v460 = vld [vmem:[%s1 + $0x490] sm:$0xff]
        %v461 = vld [vmem:[%s1 + $0x498] sm:$0xff]
        %v462 = vld [vmem:[%s1 + $0x4a0] sm:$0xff]
        %v463 = vld [vmem:[%s1 + $0x4a8] sm:$0xff]
        %v464 = vld [vmem:[%s1 + $0x4b0] sm:$0xff]
        %v465 = vld [vmem:[%s1 + $0x4b8] sm:$0xff]
        %v466 = vld [vmem:[%s1 + $0x4c0] sm:$0xff]
        %v467 = vld [vmem:[%s1 + $0x4c8] sm:$0xff]
        %v468 = vld [vmem:[%s1 + $0x4d0] sm:$0xff]
        %v469 = vld [vmem:[%s1 + $0x4d8] sm:$0xff]
        %v470 = vld [vmem:[%s1 + $0x4e0] sm:$0xff]
        %v471 = vld [vmem:[%s1 + $0x4e8] sm:$0xff]
        %v472 = vld [vmem:[%s1 + $0x4f0] sm:$0xff]
        %v473 = vld [vmem:[%s1 + $0x4f8] sm:$0xff]
        %v474 = vld [vmem:[%s1 + $0x500] sm:$0xff]
        %v475 = vld [vmem:[%s1 + $0x508] sm:$0xff]
        %v476 = vld [vmem:[%s1 + $0x510] sm:$0xff]
        %v477 = vld [vmem:[%s1 + $0x518] sm:$0xff]
        %v478 = vld [vmem:[%s1 + $0x520] sm:$0xff]
        %v479 = vld [vmem:[%s1 + $0x528] sm:$0xff]
        %v480 = vld [vmem:[%s1 + $0x530] sm:$0xff]
        %v481 = vld [vmem:[%s1 + $0x538] sm:$0xff]
        %v482 = vld [vmem:[%s1 + $0x540] sm:$0xff]
        %v483 = vld [vmem:[%s1 + $0x548] sm:$0xff]
        %v484 = vld [vmem:[%s1 + $0x550] sm:$0xff]
        %v485 = vld [vmem:[%s1 + $0x558] sm:$0xff]
        %v486 = vld [vmem:[%s1 + $0x560] sm:$0xff]
        %v487 = vld [vmem:[%s1 + $0x568] sm:$0xff]
        %v488 = vld [vmem:[%s1 + $0x570] sm:$0xff]
        %v489 = vld [vmem:[%s1 + $0x578] sm:$0xff]
        %v490 = vld [vmem:[%s1 + $0x580] sm:$0xff]
        %v491 = vld [vmem:[%s1 + $0x588] sm:$0xff]
        %v492 = vld [vmem:[%s1 + $0x590] sm:$0xff]
        %v493 = vld [vmem:[%s1 + $0x598] sm:$0xff]
        %v494 = vld [vmem:[%s1 + $0x5a0] sm:$0xff]
        %v495 = vld [vmem:[%s1 + $0x5a8] sm:$0xff]
        %v496 = vld [vmem:[%s1 + $0x5b0] sm:$0xff]
        %v497 = vld [vmem:[%s1 + $0x5b8] sm:$0xff]
        %v498 = vld [vmem:[%s1 + $0x5c0] sm:$0xff]
        %v499 = vld [vmem:[%s1 + $0x5c8] sm:$0xff]
        %v500 = vld [vmem:[%s1 + $0x5d0] sm:$0xff]
        %v501 = vld [vmem:[%s1 + $0x5d8] sm:$0xff]
        %v502 = vld [vmem:[%s1 + $0x5e0] sm:$0xff]
        %v503 = vld [vmem:[%s1 + $0x5e8] sm:$0xff]
        %v504 = vld [vmem:[%s1 + $0x5f0] sm:$0xff]
        %v505 = vld [vmem:[%s1 + $0x5f8] sm:$0xff]
        %v506 = vld [vmem:[%s1 + $0x600] sm:$0xff]
        %v507 = vld [vmem:[%s1 + $0x608] sm:$0xff]
        %v508 = vld [vmem:[%s1 + $0x610] sm:$0xff]
        %v509 = vld [vmem:[%s1 + $0x618] sm:$0xff]
        %v510 = vld [vmem:[%s1 + $0x620] sm:$0xff]
        %v511 = vld [vmem:[%s1 + $0x628] sm:$0xff]
        %v512 = vld [vmem:[%s1 + $0x630] sm:$0xff]
        %v513 = vld [vmem:[%s1 + $0x638] sm:$0xff]
        %v514 = vld [vmem:[%s1 + $0x640] sm:$0xff]
        %v515 = vld [vmem:[%s1 + $0x648] sm:$0xff]
        %v516 = vld [vmem:[%s1 + $0x650] sm:$0xff]
        %v517 = vld [vmem:[%s1 + $0x658] sm:$0xff]
        %v518 = vld [vmem:[%s1 + $0x660] sm:$0xff]
        %v519 = vld [vmem:[%s1 + $0x668] sm:$0xff]
        %v520 = vld [vmem:[%s1 + $0x670] sm:$0xff]
        %v521 = vld [vmem:[%s1 + $0x678] sm:$0xff]
        %v522 = vld [vmem:[%s1 + $0x680] sm:$0xff]
        %v523 = vld [vmem:[%s1 + $0x688] sm:$0xff]
        %v524 = vld [vmem:[%s1 + $0x690] sm:$0xff]
        %v525 = vld [vmem:[%s1 + $0x698] sm:$0xff]
        %v526 = vld [vmem:[%s1 + $0x6a0] sm:$0xff]
        %v527 = vld [vmem:[%s1 + $0x6a8] sm:$0xff]
        %v528 = vld [vmem:[%s1 + $0x6b0] sm:$0xff]
        %v529 = vld [vmem:[%s1 + $0x6b8] sm:$0xff]
        %v530 = vld [vmem:[%s1 + $0x6c0] sm:$0xff]
        %v531 = vld [vmem:[%s1 + $0x6c8] sm:$0xff]
        %v532 = vld [vmem:[%s1 + $0x6d0] sm:$0xff]
        %v533 = vld [vmem:[%s1 + $0x6d8] sm:$0xff]
        %v534 = vld [vmem:[%s1 + $0x6e0] sm:$0xff]
        %v535 = vld [vmem:[%s1 + $0x6e8] sm:$0xff]
        %v536 = vld [vmem:[%s1 + $0x6f0] sm:$0xff]
        %v537 = vld [vmem:[%s1 + $0x6f8] sm:$0xff]
        %v538 = vld [vmem:[%s1 + $0x700] sm:$0xff]
        %v539 = vld [vmem:[%s1 + $0x708] sm:$0xff]
        %v540 = vld [vmem:[%s1 + $0x710] sm:$0xff]
        %v541 = vld [vmem:[%s1 + $0x718] sm:$0xff]
        %v542 = vld [vmem:[%s1 + $0x720] sm:$0xff]
        %v543 = vld [vmem:[%s1 + $0x728] sm:$0xff]
        %v544 = vld [vmem:[%s1 + $0x730] sm:$0xff]
        %v545 = vld [vmem:[%s1 + $0x738] sm:$0xff]
        %v546 = vld [vmem:[%s1 + $0x740] sm:$0xff]
        %v547 = vld [vmem:[%s1 + $0x748] sm:$0xff]
        %v548 = vld [vmem:[%s1 + $0x750] sm:$0xff]
        %v549 = vld [vmem:[%s1 + $0x758] sm:$0xff]
        %v550 = vld [vmem:[%s1 + $0x760] sm:$0xff]
        %v551 = vld [vmem:[%s1 + $0x768] sm:$0xff]
        %v552 = vld [vmem:[%s1 + $0x770] sm:$0xff]
        %v553 = vld [vmem:[%s1 + $0x778] sm:$0xff]
        %v554 = vld [vmem:[%s1 + $0x780] sm:$0xff]
        %v555 = vld [vmem:[%s1 + $0x788] sm:$0xff]
        %v556 = vld [vmem:[%s1 + $0x790] sm:$0xff]
        %v557 = vld [vmem:[%s1 + $0x798] sm:$0xff]
        %v558 = vld [vmem:[%s1 + $0x7a0] sm:$0xff]
        %v559 = vld [vmem:[%s1 + $0x7a8] sm:$0xff]
        %v560 = vld [vmem:[%s1 + $0x7b0] sm:$0xff]
        %v561 = vld [vmem:[%s1 + $0x7b8] sm:$0xff]
        %v562 = vld [vmem:[%s1 + $0x7c0] sm:$0xff]
        %v563 = vld [vmem:[%s1 + $0x7c8] sm:$0xff]
        %v564 = vld [vmem:[%s1 + $0x7d0] sm:$0xff]
        %v565 = vld [vmem:[%s1 + $0x7d8] sm:$0xff]
        %v566 = vld [vmem:[%s1 + $0x7e0] sm:$0xff]
        %v567 = vld [vmem:[%s1 + $0x7e8] sm:$0xff]
        %v568 = vld [vmem:[%s1 + $0x7f0] sm:$0xff]
        %v569 = vld [vmem:[%s1 + $0x7f8] sm:$0xff]
        %v570 = vld [vmem:[%s2] sm:$0xf]
        %v572 = vlaneseq
        %v573 = vshrl.u32 %v572, 7
        %v574 = vsub.s32 0, %v573
        %v575 = vrot.slane %v570, %v574
        %v576 = vlaneseq
        %v577 = vshrl.u32 %v576, 7
        %v578 = vsub.s32 1, %v577
        %v579 = vrot.slane %v570, %v578
        %v580 = vlaneseq
        %v581 = vshrl.u32 %v580, 7
        %v582 = vsub.s32 2, %v581
        %v583 = vrot.slane %v570, %v582
        %v584 = vlaneseq
        %v585 = vshrl.u32 %v584, 7
        %v586 = vsub.s32 3, %v585
        %v587 = vrot.slane %v570, %v586
        %v596 = vunpack.c.l.b16 %v310
        %v597 = vunpack.c.h.b16 %v310
        %v598 = vunpack.c.l.b16 %v311
        %v599 = vunpack.c.h.b16 %v311
        %v600 = vunpack.c.l.b16 %v312
        %v601 = vunpack.c.h.b16 %v312
        %v602 = vunpack.c.l.b16 %v313
        %v603 = vunpack.c.h.b16 %v313
        %v604 = vpack.c.b16 %v596, %v596
        %v605 = vpack.c.b16 %v597, %v597
        %v606 = vpack.c.b16 %v598, %v598
        %v607 = vpack.c.b16 %v599, %v599
        %v608 = vpack.c.b16 %v600, %v600
        %v609 = vpack.c.b16 %v601, %v601
        %v610 = vpack.c.b16 %v602, %v602
        %v611 = vpack.c.b16 %v603, %v603
        %v876 = vunpack.c.l.b16 %v314
        %v877 = vunpack.c.h.b16 %v314
        %v878 = vunpack.c.l.b16 %v315
        %v879 = vunpack.c.h.b16 %v315
        %v880 = vunpack.c.l.b16 %v316
        %v881 = vunpack.c.h.b16 %v316
        %v882 = vunpack.c.l.b16 %v317
        %v883 = vunpack.c.h.b16 %v317
        %v884 = vunpack.c.l.b16 %v318
        %v885 = vunpack.c.h.b16 %v318
        %v886 = vunpack.c.l.b16 %v319
        %v887 = vunpack.c.h.b16 %v319
        %v888 = vunpack.c.l.b16 %v320
        %v889 = vunpack.c.h.b16 %v320
        %v890 = vunpack.c.l.b16 %v321
        %v891 = vunpack.c.h.b16 %v321
        %v892 = vunpack.c.l.b16 %v322
        %v893 = vunpack.c.h.b16 %v322
        %v894 = vunpack.c.l.b16 %v323
        %v895 = vunpack.c.h.b16 %v323
        %v896 = vunpack.c.l.b16 %v324
        %v897 = vunpack.c.h.b16 %v324
        %v898 = vunpack.c.l.b16 %v325
        %v899 = vunpack.c.h.b16 %v325
        %v900 = vunpack.c.l.b16 %v326
        %v901 = vunpack.c.h.b16 %v326
        %v902 = vunpack.c.l.b16 %v327
        %v903 = vunpack.c.h.b16 %v327
        %v904 = vunpack.c.l.b16 %v328
        %v905 = vunpack.c.h.b16 %v328
        %v906 = vunpack.c.l.b16 %v329
        %v907 = vunpack.c.h.b16 %v329
        %v908 = vunpack.c.l.b16 %v330
        %v909 = vunpack.c.h.b16 %v330
        %v910 = vunpack.c.l.b16 %v331
        %v911 = vunpack.c.h.b16 %v331
        %v912 = vunpack.c.l.b16 %v332
        %v913 = vunpack.c.h.b16 %v332
        %v914 = vunpack.c.l.b16 %v333
        %v915 = vunpack.c.h.b16 %v333
        %v916 = vunpack.c.l.b16 %v334
        %v917 = vunpack.c.h.b16 %v334
        %v918 = vunpack.c.l.b16 %v335
        %v919 = vunpack.c.h.b16 %v335
        %v920 = vunpack.c.l.b16 %v336
        %v921 = vunpack.c.h.b16 %v336
        %v922 = vunpack.c.l.b16 %v337
        %v923 = vunpack.c.h.b16 %v337
        %v924 = vunpack.c.l.b16 %v338
        %v925 = vunpack.c.h.b16 %v338
        %v926 = vunpack.c.l.b16 %v339
        %v927 = vunpack.c.h.b16 %v339
        %v928 = vunpack.c.l.b16 %v340
        %v929 = vunpack.c.h.b16 %v340
        %v930 = vunpack.c.l.b16 %v341
        %v931 = vunpack.c.h.b16 %v341
        %v932 = vunpack.c.l.b16 %v342
        %v933 = vunpack.c.h.b16 %v342
        %v934 = vunpack.c.l.b16 %v343
        %v935 = vunpack.c.h.b16 %v343
        %v936 = vunpack.c.l.b16 %v344
        %v937 = vunpack.c.h.b16 %v344
        %v938 = vunpack.c.l.b16 %v345
        %v939 = vunpack.c.h.b16 %v345
        %v940 = vunpack.c.l.b16 %v346
        %v941 = vunpack.c.h.b16 %v346
        %v942 = vunpack.c.l.b16 %v347
        %v943 = vunpack.c.h.b16 %v347
        %v944 = vunpack.c.l.b16 %v348
        %v945 = vunpack.c.h.b16 %v348
        %v946 = vunpack.c.l.b16 %v349
        %v947 = vunpack.c.h.b16 %v349
        %v948 = vunpack.c.l.b16 %v350
        %v949 = vunpack.c.h.b16 %v350
        %v950 = vunpack.c.l.b16 %v351
        %v951 = vunpack.c.h.b16 %v351
        %v952 = vunpack.c.l.b16 %v352
        %v953 = vunpack.c.h.b16 %v352
        %v954 = vunpack.c.l.b16 %v353
        %v955 = vunpack.c.h.b16 %v353
        %v956 = vunpack.c.l.b16 %v354
        %v957 = vunpack.c.h.b16 %v354
        %v958 = vunpack.c.l.b16 %v355
        %v959 = vunpack.c.h.b16 %v355
        %v960 = vunpack.c.l.b16 %v356
        %v961 = vunpack.c.h.b16 %v356
        %v962 = vunpack.c.l.b16 %v357
        %v963 = vunpack.c.h.b16 %v357
        %v964 = vunpack.c.l.b16 %v358
        %v965 = vunpack.c.h.b16 %v358
        %v966 = vunpack.c.l.b16 %v359
        %v967 = vunpack.c.h.b16 %v359
        %v968 = vunpack.c.l.b16 %v360
        %v969 = vunpack.c.h.b16 %v360
        %v970 = vunpack.c.l.b16 %v361
        %v971 = vunpack.c.h.b16 %v361
        %v972 = vunpack.c.l.b16 %v362
        %v973 = vunpack.c.h.b16 %v362
        %v974 = vunpack.c.l.b16 %v363
        %v975 = vunpack.c.h.b16 %v363
        %v976 = vunpack.c.l.b16 %v364
        %v977 = vunpack.c.h.b16 %v364
        %v978 = vunpack.c.l.b16 %v365
        %v979 = vunpack.c.h.b16 %v365
        %v980 = vunpack.c.l.b16 %v366
        %v981 = vunpack.c.h.b16 %v366
        %v982 = vunpack.c.l.b16 %v367
        %v983 = vunpack.c.h.b16 %v367
        %v984 = vunpack.c.l.b16 %v368
        %v985 = vunpack.c.h.b16 %v368
        %v986 = vunpack.c.l.b16 %v369
        %v987 = vunpack.c.h.b16 %v369
        %v988 = vunpack.c.l.b16 %v370
        %v989 = vunpack.c.h.b16 %v370
        %v990 = vunpack.c.l.b16 %v371
        %v991 = vunpack.c.h.b16 %v371
        %v992 = vunpack.c.l.b16 %v372
        %v993 = vunpack.c.h.b16 %v372
        %v994 = vunpack.c.l.b16 %v373
        %v995 = vunpack.c.h.b16 %v373
        %v996 = vunpack.c.l.b16 %v374
        %v997 = vunpack.c.h.b16 %v374
        %v998 = vunpack.c.l.b16 %v375
        %v999 = vunpack.c.h.b16 %v375
        %v1000 = vunpack.c.l.b16 %v376
        %v1001 = vunpack.c.h.b16 %v376
        %v1002 = vunpack.c.l.b16 %v377
        %v1003 = vunpack.c.h.b16 %v377
        %v1004 = vunpack.c.l.b16 %v378
        %v1005 = vunpack.c.h.b16 %v378
        %v1006 = vunpack.c.l.b16 %v379
        %v1007 = vunpack.c.h.b16 %v379
        %v1008 = vunpack.c.l.b16 %v380
        %v1009 = vunpack.c.h.b16 %v380
        %v1010 = vunpack.c.l.b16 %v381
        %v1011 = vunpack.c.h.b16 %v381
        %v1012 = vunpack.c.l.b16 %v382
        %v1013 = vunpack.c.h.b16 %v382
        %v1014 = vunpack.c.l.b16 %v383
        %v1015 = vunpack.c.h.b16 %v383
        %v1016 = vunpack.c.l.b16 %v384
        %v1017 = vunpack.c.h.b16 %v384
        %v1018 = vunpack.c.l.b16 %v385
        %v1019 = vunpack.c.h.b16 %v385
        %v1020 = vunpack.c.l.b16 %v386
        %v1021 = vunpack.c.h.b16 %v386
        %v1022 = vunpack.c.l.b16 %v387
        %v1023 = vunpack.c.h.b16 %v387
        %v1024 = vunpack.c.l.b16 %v388
        %v1025 = vunpack.c.h.b16 %v388
        %v1026 = vunpack.c.l.b16 %v389
        %v1027 = vunpack.c.h.b16 %v389
        %v1028 = vunpack.c.l.b16 %v390
        %v1029 = vunpack.c.h.b16 %v390
        %v1030 = vunpack.c.l.b16 %v391
        %v1031 = vunpack.c.h.b16 %v391
        %v1032 = vunpack.c.l.b16 %v392
        %v1033 = vunpack.c.h.b16 %v392
        %v1034 = vunpack.c.l.b16 %v393
        %v1035 = vunpack.c.h.b16 %v393
        %v1036 = vunpack.c.l.b16 %v394
        %v1037 = vunpack.c.h.b16 %v394
        %v1038 = vunpack.c.l.b16 %v395
        %v1039 = vunpack.c.h.b16 %v395
        %v1040 = vunpack.c.l.b16 %v396
        %v1041 = vunpack.c.h.b16 %v396
        %v1042 = vunpack.c.l.b16 %v397
        %v1043 = vunpack.c.h.b16 %v397
        %v1044 = vunpack.c.l.b16 %v398
        %v1045 = vunpack.c.h.b16 %v398
        %v1046 = vunpack.c.l.b16 %v399
        %v1047 = vunpack.c.h.b16 %v399
        %v1048 = vunpack.c.l.b16 %v400
        %v1049 = vunpack.c.h.b16 %v400
        %v1050 = vunpack.c.l.b16 %v401
        %v1051 = vunpack.c.h.b16 %v401
        %v1052 = vunpack.c.l.b16 %v402
        %v1053 = vunpack.c.h.b16 %v402
        %v1054 = vunpack.c.l.b16 %v403
        %v1055 = vunpack.c.h.b16 %v403
        %v1056 = vunpack.c.l.b16 %v404
        %v1057 = vunpack.c.h.b16 %v404
        %v1058 = vunpack.c.l.b16 %v405
        %v1059 = vunpack.c.h.b16 %v405
        %v1060 = vunpack.c.l.b16 %v406
        %v1061 = vunpack.c.h.b16 %v406
        %v1062 = vunpack.c.l.b16 %v407
        %v1063 = vunpack.c.h.b16 %v407
        %v1064 = vunpack.c.l.b16 %v408
        %v1065 = vunpack.c.h.b16 %v408
        %v1066 = vunpack.c.l.b16 %v409
        %v1067 = vunpack.c.h.b16 %v409
        %v1068 = vunpack.c.l.b16 %v410
        %v1069 = vunpack.c.h.b16 %v410
        %v1070 = vunpack.c.l.b16 %v411
        %v1071 = vunpack.c.h.b16 %v411
        %v1072 = vunpack.c.l.b16 %v412
        %v1073 = vunpack.c.h.b16 %v412
        %v1074 = vunpack.c.l.b16 %v413
        %v1075 = vunpack.c.h.b16 %v413
        %v1076 = vunpack.c.l.b16 %v414
        %v1077 = vunpack.c.h.b16 %v414
        %v1078 = vunpack.c.l.b16 %v415
        %v1079 = vunpack.c.h.b16 %v415
        %v1080 = vunpack.c.l.b16 %v416
        %v1081 = vunpack.c.h.b16 %v416
        %v1082 = vunpack.c.l.b16 %v417
        %v1083 = vunpack.c.h.b16 %v417
        %v1084 = vunpack.c.l.b16 %v418
        %v1085 = vunpack.c.h.b16 %v418
        %v1086 = vunpack.c.l.b16 %v419
        %v1087 = vunpack.c.h.b16 %v419
        %v1088 = vunpack.c.l.b16 %v420
        %v1089 = vunpack.c.h.b16 %v420
        %v1090 = vunpack.c.l.b16 %v421
        %v1091 = vunpack.c.h.b16 %v421
        %v1092 = vunpack.c.l.b16 %v422
        %v1093 = vunpack.c.h.b16 %v422
        %v1094 = vunpack.c.l.b16 %v423
        %v1095 = vunpack.c.h.b16 %v423
        %v1096 = vunpack.c.l.b16 %v424
        %v1097 = vunpack.c.h.b16 %v424
        %v1098 = vunpack.c.l.b16 %v425
        %v1099 = vunpack.c.h.b16 %v425
        %v1100 = vunpack.c.l.b16 %v426
        %v1101 = vunpack.c.h.b16 %v426
        %v1102 = vunpack.c.l.b16 %v427
        %v1103 = vunpack.c.h.b16 %v427
        %v1104 = vunpack.c.l.b16 %v428
        %v1105 = vunpack.c.h.b16 %v428
        %v1106 = vunpack.c.l.b16 %v429
        %v1107 = vunpack.c.h.b16 %v429
        %v1108 = vunpack.c.l.b16 %v430
        %v1109 = vunpack.c.h.b16 %v430
        %v1110 = vunpack.c.l.b16 %v431
        %v1111 = vunpack.c.h.b16 %v431
        %v1112 = vunpack.c.l.b16 %v432
        %v1113 = vunpack.c.h.b16 %v432
        %v1114 = vunpack.c.l.b16 %v433
        %v1115 = vunpack.c.h.b16 %v433
        %v1116 = vunpack.c.l.b16 %v434
        %v1117 = vunpack.c.h.b16 %v434
        %v1118 = vunpack.c.l.b16 %v435
        %v1119 = vunpack.c.h.b16 %v435
        %v1120 = vunpack.c.l.b16 %v436
        %v1121 = vunpack.c.h.b16 %v436
        %v1122 = vunpack.c.l.b16 %v437
        %v1123 = vunpack.c.h.b16 %v437
        %v1124 = vunpack.c.l.b16 %v438
        %v1125 = vunpack.c.h.b16 %v438
        %v1126 = vunpack.c.l.b16 %v439
        %v1127 = vunpack.c.h.b16 %v439
        %v1128 = vunpack.c.l.b16 %v440
        %v1129 = vunpack.c.h.b16 %v440
        %v1130 = vunpack.c.l.b16 %v441
        %v1131 = vunpack.c.h.b16 %v441
        %v1132 = vunpack.c.l.b16 %v442
        %v1133 = vunpack.c.h.b16 %v442
        %v1134 = vunpack.c.l.b16 %v443
        %v1135 = vunpack.c.h.b16 %v443
        %v1136 = vunpack.c.l.b16 %v444
        %v1137 = vunpack.c.h.b16 %v444
        %v1138 = vunpack.c.l.b16 %v445
        %v1139 = vunpack.c.h.b16 %v445
        %v1140 = vunpack.c.l.b16 %v446
        %v1141 = vunpack.c.h.b16 %v446
        %v1142 = vunpack.c.l.b16 %v447
        %v1143 = vunpack.c.h.b16 %v447
        %v1144 = vunpack.c.l.b16 %v448
        %v1145 = vunpack.c.h.b16 %v448
        %v1146 = vunpack.c.l.b16 %v449
        %v1147 = vunpack.c.h.b16 %v449
        %v1148 = vunpack.c.l.b16 %v450
        %v1149 = vunpack.c.h.b16 %v450
        %v1150 = vunpack.c.l.b16 %v451
        %v1151 = vunpack.c.h.b16 %v451
        %v1152 = vunpack.c.l.b16 %v452
        %v1153 = vunpack.c.h.b16 %v452
        %v1154 = vunpack.c.l.b16 %v453
        %v1155 = vunpack.c.h.b16 %v453
        %v1156 = vunpack.c.l.b16 %v454
        %v1157 = vunpack.c.h.b16 %v454
        %v1158 = vunpack.c.l.b16 %v455
        %v1159 = vunpack.c.h.b16 %v455
        %v1160 = vunpack.c.l.b16 %v456
        %v1161 = vunpack.c.h.b16 %v456
        %v1162 = vunpack.c.l.b16 %v457
        %v1163 = vunpack.c.h.b16 %v457
        %v1164 = vunpack.c.l.b16 %v458
        %v1165 = vunpack.c.h.b16 %v458
        %v1166 = vunpack.c.l.b16 %v459
        %v1167 = vunpack.c.h.b16 %v459
        %v1168 = vunpack.c.l.b16 %v460
        %v1169 = vunpack.c.h.b16 %v460
        %v1170 = vunpack.c.l.b16 %v461
        %v1171 = vunpack.c.h.b16 %v461
        %v1172 = vunpack.c.l.b16 %v462
        %v1173 = vunpack.c.h.b16 %v462
        %v1174 = vunpack.c.l.b16 %v463
        %v1175 = vunpack.c.h.b16 %v463
        %v1176 = vunpack.c.l.b16 %v464
        %v1177 = vunpack.c.h.b16 %v464
        %v1178 = vunpack.c.l.b16 %v465
        %v1179 = vunpack.c.h.b16 %v465
        %v1180 = vunpack.c.l.b16 %v466
        %v1181 = vunpack.c.h.b16 %v466
        %v1182 = vunpack.c.l.b16 %v467
        %v1183 = vunpack.c.h.b16 %v467
        %v1184 = vunpack.c.l.b16 %v468
        %v1185 = vunpack.c.h.b16 %v468
        %v1186 = vunpack.c.l.b16 %v469
        %v1187 = vunpack.c.h.b16 %v469
        %v1188 = vunpack.c.l.b16 %v470
        %v1189 = vunpack.c.h.b16 %v470
        %v1190 = vunpack.c.l.b16 %v471
        %v1191 = vunpack.c.h.b16 %v471
        %v1192 = vunpack.c.l.b16 %v472
        %v1193 = vunpack.c.h.b16 %v472
        %v1194 = vunpack.c.l.b16 %v473
        %v1195 = vunpack.c.h.b16 %v473
        %v1196 = vunpack.c.l.b16 %v474
        %v1197 = vunpack.c.h.b16 %v474
        %v1198 = vunpack.c.l.b16 %v475
        %v1199 = vunpack.c.h.b16 %v475
        %v1200 = vunpack.c.l.b16 %v476
        %v1201 = vunpack.c.h.b16 %v476
        %v1202 = vunpack.c.l.b16 %v477
        %v1203 = vunpack.c.h.b16 %v477
        %v1204 = vunpack.c.l.b16 %v478
        %v1205 = vunpack.c.h.b16 %v478
        %v1206 = vunpack.c.l.b16 %v479
        %v1207 = vunpack.c.h.b16 %v479
        %v1208 = vunpack.c.l.b16 %v480
        %v1209 = vunpack.c.h.b16 %v480
        %v1210 = vunpack.c.l.b16 %v481
        %v1211 = vunpack.c.h.b16 %v481
        %v1212 = vunpack.c.l.b16 %v482
        %v1213 = vunpack.c.h.b16 %v482
        %v1214 = vunpack.c.l.b16 %v483
        %v1215 = vunpack.c.h.b16 %v483
        %v1216 = vunpack.c.l.b16 %v484
        %v1217 = vunpack.c.h.b16 %v484
        %v1218 = vunpack.c.l.b16 %v485
        %v1219 = vunpack.c.h.b16 %v485
        %v1220 = vunpack.c.l.b16 %v486
        %v1221 = vunpack.c.h.b16 %v486
        %v1222 = vunpack.c.l.b16 %v487
        %v1223 = vunpack.c.h.b16 %v487
        %v1224 = vunpack.c.l.b16 %v488
        %v1225 = vunpack.c.h.b16 %v488
        %v1226 = vunpack.c.l.b16 %v489
        %v1227 = vunpack.c.h.b16 %v489
        %v1228 = vunpack.c.l.b16 %v490
        %v1229 = vunpack.c.h.b16 %v490
        %v1230 = vunpack.c.l.b16 %v491
        %v1231 = vunpack.c.h.b16 %v491
        %v1232 = vunpack.c.l.b16 %v492
        %v1233 = vunpack.c.h.b16 %v492
        %v1234 = vunpack.c.l.b16 %v493
        %v1235 = vunpack.c.h.b16 %v493
        %v1236 = vunpack.c.l.b16 %v494
        %v1237 = vunpack.c.h.b16 %v494
        %v1238 = vunpack.c.l.b16 %v495
        %v1239 = vunpack.c.h.b16 %v495
        %v1240 = vunpack.c.l.b16 %v496
        %v1241 = vunpack.c.h.b16 %v496
        %v1242 = vunpack.c.l.b16 %v497
        %v1243 = vunpack.c.h.b16 %v497
        %v1244 = vunpack.c.l.b16 %v498
        %v1245 = vunpack.c.h.b16 %v498
        %v1246 = vunpack.c.l.b16 %v499
        %v1247 = vunpack.c.h.b16 %v499
        %v1248 = vunpack.c.l.b16 %v500
        %v1249 = vunpack.c.h.b16 %v500
        %v1250 = vunpack.c.l.b16 %v501
        %v1251 = vunpack.c.h.b16 %v501
        %v1252 = vunpack.c.l.b16 %v502
        %v1253 = vunpack.c.h.b16 %v502
        %v1254 = vunpack.c.l.b16 %v503
        %v1255 = vunpack.c.h.b16 %v503
        %v1256 = vunpack.c.l.b16 %v504
        %v1257 = vunpack.c.h.b16 %v504
        %v1258 = vunpack.c.l.b16 %v505
        %v1259 = vunpack.c.h.b16 %v505
        %v1260 = vunpack.c.l.b16 %v506
        %v1261 = vunpack.c.h.b16 %v506
        %v1262 = vunpack.c.l.b16 %v507
        %v1263 = vunpack.c.h.b16 %v507
        %v1264 = vunpack.c.l.b16 %v508
        %v1265 = vunpack.c.h.b16 %v508
        %v1266 = vunpack.c.l.b16 %v509
        %v1267 = vunpack.c.h.b16 %v509
        %v1268 = vunpack.c.l.b16 %v510
        %v1269 = vunpack.c.h.b16 %v510
        %v1270 = vunpack.c.l.b16 %v511
        %v1271 = vunpack.c.h.b16 %v511
        %v1272 = vunpack.c.l.b16 %v512
        %v1273 = vunpack.c.h.b16 %v512
        %v1274 = vunpack.c.l.b16 %v513
        %v1275 = vunpack.c.h.b16 %v513
        %v1276 = vunpack.c.l.b16 %v514
        %v1277 = vunpack.c.h.b16 %v514
        %v1278 = vunpack.c.l.b16 %v515
        %v1279 = vunpack.c.h.b16 %v515
        %v1280 = vunpack.c.l.b16 %v516
        %v1281 = vunpack.c.h.b16 %v516
        %v1282 = vunpack.c.l.b16 %v517
        %v1283 = vunpack.c.h.b16 %v517
        %v1284 = vunpack.c.l.b16 %v518
        %v1285 = vunpack.c.h.b16 %v518
        %v1286 = vunpack.c.l.b16 %v519
        %v1287 = vunpack.c.h.b16 %v519
        %v1288 = vunpack.c.l.b16 %v520
        %v1289 = vunpack.c.h.b16 %v520
        %v1290 = vunpack.c.l.b16 %v521
        %v1291 = vunpack.c.h.b16 %v521
        %v1292 = vunpack.c.l.b16 %v522
        %v1293 = vunpack.c.h.b16 %v522
        %v1294 = vunpack.c.l.b16 %v523
        %v1295 = vunpack.c.h.b16 %v523
        %v1296 = vunpack.c.l.b16 %v524
        %v1297 = vunpack.c.h.b16 %v524
        %v1298 = vunpack.c.l.b16 %v525
        %v1299 = vunpack.c.h.b16 %v525
        %v1300 = vunpack.c.l.b16 %v526
        %v1301 = vunpack.c.h.b16 %v526
        %v1302 = vunpack.c.l.b16 %v527
        %v1303 = vunpack.c.h.b16 %v527
        %v1304 = vunpack.c.l.b16 %v528
        %v1305 = vunpack.c.h.b16 %v528
        %v1306 = vunpack.c.l.b16 %v529
        %v1307 = vunpack.c.h.b16 %v529
        %v1308 = vunpack.c.l.b16 %v530
        %v1309 = vunpack.c.h.b16 %v530
        %v1310 = vunpack.c.l.b16 %v531
        %v1311 = vunpack.c.h.b16 %v531
        %v1312 = vunpack.c.l.b16 %v532
        %v1313 = vunpack.c.h.b16 %v532
        %v1314 = vunpack.c.l.b16 %v533
        %v1315 = vunpack.c.h.b16 %v533
        %v1316 = vunpack.c.l.b16 %v534
        %v1317 = vunpack.c.h.b16 %v534
        %v1318 = vunpack.c.l.b16 %v535
        %v1319 = vunpack.c.h.b16 %v535
        %v1320 = vunpack.c.l.b16 %v536
        %v1321 = vunpack.c.h.b16 %v536
        %v1322 = vunpack.c.l.b16 %v537
        %v1323 = vunpack.c.h.b16 %v537
        %v1324 = vunpack.c.l.b16 %v538
        %v1325 = vunpack.c.h.b16 %v538
        %v1326 = vunpack.c.l.b16 %v539
        %v1327 = vunpack.c.h.b16 %v539
        %v1328 = vunpack.c.l.b16 %v540
        %v1329 = vunpack.c.h.b16 %v540
        %v1330 = vunpack.c.l.b16 %v541
        %v1331 = vunpack.c.h.b16 %v541
        %v1332 = vunpack.c.l.b16 %v542
        %v1333 = vunpack.c.h.b16 %v542
        %v1334 = vunpack.c.l.b16 %v543
        %v1335 = vunpack.c.h.b16 %v543
        %v1336 = vunpack.c.l.b16 %v544
        %v1337 = vunpack.c.h.b16 %v544
        %v1338 = vunpack.c.l.b16 %v545
        %v1339 = vunpack.c.h.b16 %v545
        %v1340 = vunpack.c.l.b16 %v546
        %v1341 = vunpack.c.h.b16 %v546
        %v1342 = vunpack.c.l.b16 %v547
        %v1343 = vunpack.c.h.b16 %v547
        %v1344 = vunpack.c.l.b16 %v548
        %v1345 = vunpack.c.h.b16 %v548
        %v1346 = vunpack.c.l.b16 %v549
        %v1347 = vunpack.c.h.b16 %v549
        %v1348 = vunpack.c.l.b16 %v550
        %v1349 = vunpack.c.h.b16 %v550
        %v1350 = vunpack.c.l.b16 %v551
        %v1351 = vunpack.c.h.b16 %v551
        %v1352 = vunpack.c.l.b16 %v552
        %v1353 = vunpack.c.h.b16 %v552
        %v1354 = vunpack.c.l.b16 %v553
        %v1355 = vunpack.c.h.b16 %v553
        %v1356 = vunpack.c.l.b16 %v554
        %v1357 = vunpack.c.h.b16 %v554
        %v1358 = vunpack.c.l.b16 %v555
        %v1359 = vunpack.c.h.b16 %v555
        %v1360 = vunpack.c.l.b16 %v556
        %v1361 = vunpack.c.h.b16 %v556
        %v1362 = vunpack.c.l.b16 %v557
        %v1363 = vunpack.c.h.b16 %v557
        %v1364 = vunpack.c.l.b16 %v558
        %v1365 = vunpack.c.h.b16 %v558
        %v1366 = vunpack.c.l.b16 %v559
        %v1367 = vunpack.c.h.b16 %v559
        %v1368 = vunpack.c.l.b16 %v560
        %v1369 = vunpack.c.h.b16 %v560
        %v1370 = vunpack.c.l.b16 %v561
        %v1371 = vunpack.c.h.b16 %v561
        %v1372 = vunpack.c.l.b16 %v562
        %v1373 = vunpack.c.h.b16 %v562
        %v1374 = vunpack.c.l.b16 %v563
        %v1375 = vunpack.c.h.b16 %v563
        %v1376 = vunpack.c.l.b16 %v564
        %v1377 = vunpack.c.h.b16 %v564
        %v1378 = vunpack.c.l.b16 %v565
        %v1379 = vunpack.c.h.b16 %v565
        %v1380 = vunpack.c.l.b16 %v566
        %v1381 = vunpack.c.h.b16 %v566
        %v1382 = vunpack.c.l.b16 %v567
        %v1383 = vunpack.c.h.b16 %v567
        %v1384 = vunpack.c.l.b16 %v568
        %v1385 = vunpack.c.h.b16 %v568
        %v1386 = vunpack.c.l.b16 %v569
        %v1387 = vunpack.c.h.b16 %v569
        %v1388 = vpack.c.b16 %v880, %v876
        %v1389 = vpack.c.b16 %v881, %v877
        %v1390 = vpack.c.b16 %v882, %v878
        %v1391 = vpack.c.b16 %v883, %v879
        %v1392 = vpack.c.b16 %v888, %v884
        %v1393 = vpack.c.b16 %v889, %v885
        %v1394 = vpack.c.b16 %v890, %v886
        %v1395 = vpack.c.b16 %v891, %v887
        %v1396 = vpack.c.b16 %v896, %v892
        %v1397 = vpack.c.b16 %v897, %v893
        %v1398 = vpack.c.b16 %v898, %v894
        %v1399 = vpack.c.b16 %v899, %v895
        %v1400 = vpack.c.b16 %v904, %v900
        %v1401 = vpack.c.b16 %v905, %v901
        %v1402 = vpack.c.b16 %v906, %v902
        %v1403 = vpack.c.b16 %v907, %v903
        %v1404 = vpack.c.b16 %v912, %v908
        %v1405 = vpack.c.b16 %v913, %v909
        %v1406 = vpack.c.b16 %v914, %v910
        %v1407 = vpack.c.b16 %v915, %v911
        %v1408 = vpack.c.b16 %v920, %v916
        %v1409 = vpack.c.b16 %v921, %v917
        %v1410 = vpack.c.b16 %v922, %v918
        %v1411 = vpack.c.b16 %v923, %v919
        %v1412 = vpack.c.b16 %v928, %v924
        %v1413 = vpack.c.b16 %v929, %v925
        %v1414 = vpack.c.b16 %v930, %v926
        %v1415 = vpack.c.b16 %v931, %v927
        %v1416 = vpack.c.b16 %v936, %v932
        %v1417 = vpack.c.b16 %v937, %v933
        %v1418 = vpack.c.b16 %v938, %v934
        %v1419 = vpack.c.b16 %v939, %v935
        %v1420 = vpack.c.b16 %v944, %v940
        %v1421 = vpack.c.b16 %v945, %v941
        %v1422 = vpack.c.b16 %v946, %v942
        %v1423 = vpack.c.b16 %v947, %v943
        %v1424 = vpack.c.b16 %v952, %v948
        %v1425 = vpack.c.b16 %v953, %v949
        %v1426 = vpack.c.b16 %v954, %v950
        %v1427 = vpack.c.b16 %v955, %v951
        %v1428 = vpack.c.b16 %v960, %v956
        %v1429 = vpack.c.b16 %v961, %v957
        %v1430 = vpack.c.b16 %v962, %v958
        %v1431 = vpack.c.b16 %v963, %v959
        %v1432 = vpack.c.b16 %v968, %v964
        %v1433 = vpack.c.b16 %v969, %v965
        %v1434 = vpack.c.b16 %v970, %v966
        %v1435 = vpack.c.b16 %v971, %v967
        %v1436 = vpack.c.b16 %v976, %v972
        %v1437 = vpack.c.b16 %v977, %v973
        %v1438 = vpack.c.b16 %v978, %v974
        %v1439 = vpack.c.b16 %v979, %v975
        %v1440 = vpack.c.b16 %v984, %v980
        %v1441 = vpack.c.b16 %v985, %v981
        %v1442 = vpack.c.b16 %v986, %v982
        %v1443 = vpack.c.b16 %v987, %v983
        %v1444 = vpack.c.b16 %v992, %v988
        %v1445 = vpack.c.b16 %v993, %v989
        %v1446 = vpack.c.b16 %v994, %v990
        %v1447 = vpack.c.b16 %v995, %v991
        %v1448 = vpack.c.b16 %v1000, %v996
        %v1449 = vpack.c.b16 %v1001, %v997
        %v1450 = vpack.c.b16 %v1002, %v998
        %v1451 = vpack.c.b16 %v1003, %v999
        %v1452 = vpack.c.b16 %v1008, %v1004
        %v1453 = vpack.c.b16 %v1009, %v1005
        %v1454 = vpack.c.b16 %v1010, %v1006
        %v1455 = vpack.c.b16 %v1011, %v1007
        %v1456 = vpack.c.b16 %v1016, %v1012
        %v1457 = vpack.c.b16 %v1017, %v1013
        %v1458 = vpack.c.b16 %v1018, %v1014
        %v1459 = vpack.c.b16 %v1019, %v1015
        %v1460 = vpack.c.b16 %v1024, %v1020
        %v1461 = vpack.c.b16 %v1025, %v1021
        %v1462 = vpack.c.b16 %v1026, %v1022
        %v1463 = vpack.c.b16 %v1027, %v1023
        %v1464 = vpack.c.b16 %v1032, %v1028
        %v1465 = vpack.c.b16 %v1033, %v1029
        %v1466 = vpack.c.b16 %v1034, %v1030
        %v1467 = vpack.c.b16 %v1035, %v1031
        %v1468 = vpack.c.b16 %v1040, %v1036
        %v1469 = vpack.c.b16 %v1041, %v1037
        %v1470 = vpack.c.b16 %v1042, %v1038
        %v1471 = vpack.c.b16 %v1043, %v1039
        %v1472 = vpack.c.b16 %v1048, %v1044
        %v1473 = vpack.c.b16 %v1049, %v1045
        %v1474 = vpack.c.b16 %v1050, %v1046
        %v1475 = vpack.c.b16 %v1051, %v1047
        %v1476 = vpack.c.b16 %v1056, %v1052
        %v1477 = vpack.c.b16 %v1057, %v1053
        %v1478 = vpack.c.b16 %v1058, %v1054
        %v1479 = vpack.c.b16 %v1059, %v1055
        %v1480 = vpack.c.b16 %v1064, %v1060
        %v1481 = vpack.c.b16 %v1065, %v1061
        %v1482 = vpack.c.b16 %v1066, %v1062
        %v1483 = vpack.c.b16 %v1067, %v1063
        %v1484 = vpack.c.b16 %v1072, %v1068
        %v1485 = vpack.c.b16 %v1073, %v1069
        %v1486 = vpack.c.b16 %v1074, %v1070
        %v1487 = vpack.c.b16 %v1075, %v1071
        %v1488 = vpack.c.b16 %v1080, %v1076
        %v1489 = vpack.c.b16 %v1081, %v1077
        %v1490 = vpack.c.b16 %v1082, %v1078
        %v1491 = vpack.c.b16 %v1083, %v1079
        %v1492 = vpack.c.b16 %v1088, %v1084
        %v1493 = vpack.c.b16 %v1089, %v1085
        %v1494 = vpack.c.b16 %v1090, %v1086
        %v1495 = vpack.c.b16 %v1091, %v1087
        %v1496 = vpack.c.b16 %v1096, %v1092
        %v1497 = vpack.c.b16 %v1097, %v1093
        %v1498 = vpack.c.b16 %v1098, %v1094
        %v1499 = vpack.c.b16 %v1099, %v1095
        %v1500 = vpack.c.b16 %v1104, %v1100
        %v1501 = vpack.c.b16 %v1105, %v1101
        %v1502 = vpack.c.b16 %v1106, %v1102
        %v1503 = vpack.c.b16 %v1107, %v1103
        %v1504 = vpack.c.b16 %v1112, %v1108
        %v1505 = vpack.c.b16 %v1113, %v1109
        %v1506 = vpack.c.b16 %v1114, %v1110
        %v1507 = vpack.c.b16 %v1115, %v1111
        %v1508 = vpack.c.b16 %v1120, %v1116
        %v1509 = vpack.c.b16 %v1121, %v1117
        %v1510 = vpack.c.b16 %v1122, %v1118
        %v1511 = vpack.c.b16 %v1123, %v1119
        %v1512 = vpack.c.b16 %v1128, %v1124
        %v1513 = vpack.c.b16 %v1129, %v1125
        %v1514 = vpack.c.b16 %v1130, %v1126
        %v1515 = vpack.c.b16 %v1131, %v1127
        %v1516 = vpack.c.b16 %v1136, %v1132
        %v1517 = vpack.c.b16 %v1137, %v1133
        %v1518 = vpack.c.b16 %v1138, %v1134
        %v1519 = vpack.c.b16 %v1139, %v1135
        %v1520 = vpack.c.b16 %v1144, %v1140
        %v1521 = vpack.c.b16 %v1145, %v1141
        %v1522 = vpack.c.b16 %v1146, %v1142
        %v1523 = vpack.c.b16 %v1147, %v1143
        %v1524 = vpack.c.b16 %v1152, %v1148
        %v1525 = vpack.c.b16 %v1153, %v1149
        %v1526 = vpack.c.b16 %v1154, %v1150
        %v1527 = vpack.c.b16 %v1155, %v1151
        %v1528 = vpack.c.b16 %v1160, %v1156
        %v1529 = vpack.c.b16 %v1161, %v1157
        %v1530 = vpack.c.b16 %v1162, %v1158
        %v1531 = vpack.c.b16 %v1163, %v1159
        %v1532 = vpack.c.b16 %v1168, %v1164
        %v1533 = vpack.c.b16 %v1169, %v1165
        %v1534 = vpack.c.b16 %v1170, %v1166
        %v1535 = vpack.c.b16 %v1171, %v1167
        %v1536 = vpack.c.b16 %v1176, %v1172
        %v1537 = vpack.c.b16 %v1177, %v1173
        %v1538 = vpack.c.b16 %v1178, %v1174
        %v1539 = vpack.c.b16 %v1179, %v1175
        %v1540 = vpack.c.b16 %v1184, %v1180
        %v1541 = vpack.c.b16 %v1185, %v1181
        %v1542 = vpack.c.b16 %v1186, %v1182
        %v1543 = vpack.c.b16 %v1187, %v1183
        %v1544 = vpack.c.b16 %v1192, %v1188
        %v1545 = vpack.c.b16 %v1193, %v1189
        %v1546 = vpack.c.b16 %v1194, %v1190
        %v1547 = vpack.c.b16 %v1195, %v1191
        %v1548 = vpack.c.b16 %v1200, %v1196
        %v1549 = vpack.c.b16 %v1201, %v1197
        %v1550 = vpack.c.b16 %v1202, %v1198
        %v1551 = vpack.c.b16 %v1203, %v1199
        %v1552 = vpack.c.b16 %v1208, %v1204
        %v1553 = vpack.c.b16 %v1209, %v1205
        %v1554 = vpack.c.b16 %v1210, %v1206
        %v1555 = vpack.c.b16 %v1211, %v1207
        %v1556 = vpack.c.b16 %v1216, %v1212
        %v1557 = vpack.c.b16 %v1217, %v1213
        %v1558 = vpack.c.b16 %v1218, %v1214
        %v1559 = vpack.c.b16 %v1219, %v1215
        %v1560 = vpack.c.b16 %v1224, %v1220
        %v1561 = vpack.c.b16 %v1225, %v1221
        %v1562 = vpack.c.b16 %v1226, %v1222
        %v1563 = vpack.c.b16 %v1227, %v1223
        %v1564 = vpack.c.b16 %v1232, %v1228
        %v1565 = vpack.c.b16 %v1233, %v1229
        %v1566 = vpack.c.b16 %v1234, %v1230
        %v1567 = vpack.c.b16 %v1235, %v1231
        %v1568 = vpack.c.b16 %v1240, %v1236
        %v1569 = vpack.c.b16 %v1241, %v1237
        %v1570 = vpack.c.b16 %v1242, %v1238
        %v1571 = vpack.c.b16 %v1243, %v1239
        %v1572 = vpack.c.b16 %v1248, %v1244
        %v1573 = vpack.c.b16 %v1249, %v1245
        %v1574 = vpack.c.b16 %v1250, %v1246
        %v1575 = vpack.c.b16 %v1251, %v1247
        %v1576 = vpack.c.b16 %v1256, %v1252
        %v1577 = vpack.c.b16 %v1257, %v1253
        %v1578 = vpack.c.b16 %v1258, %v1254
        %v1579 = vpack.c.b16 %v1259, %v1255
        %v1580 = vpack.c.b16 %v1264, %v1260
        %v1581 = vpack.c.b16 %v1265, %v1261
        %v1582 = vpack.c.b16 %v1266, %v1262
        %v1583 = vpack.c.b16 %v1267, %v1263
        %v1584 = vpack.c.b16 %v1272, %v1268
        %v1585 = vpack.c.b16 %v1273, %v1269
        %v1586 = vpack.c.b16 %v1274, %v1270
        %v1587 = vpack.c.b16 %v1275, %v1271
        %v1588 = vpack.c.b16 %v1280, %v1276
        %v1589 = vpack.c.b16 %v1281, %v1277
        %v1590 = vpack.c.b16 %v1282, %v1278
        %v1591 = vpack.c.b16 %v1283, %v1279
        %v1592 = vpack.c.b16 %v1288, %v1284
        %v1593 = vpack.c.b16 %v1289, %v1285
        %v1594 = vpack.c.b16 %v1290, %v1286
        %v1595 = vpack.c.b16 %v1291, %v1287
        %v1596 = vpack.c.b16 %v1296, %v1292
        %v1597 = vpack.c.b16 %v1297, %v1293
        %v1598 = vpack.c.b16 %v1298, %v1294
        %v1599 = vpack.c.b16 %v1299, %v1295
        %v1600 = vpack.c.b16 %v1304, %v1300
        %v1601 = vpack.c.b16 %v1305, %v1301
        %v1602 = vpack.c.b16 %v1306, %v1302
        %v1603 = vpack.c.b16 %v1307, %v1303
        %v1604 = vpack.c.b16 %v1312, %v1308
        %v1605 = vpack.c.b16 %v1313, %v1309
        %v1606 = vpack.c.b16 %v1314, %v1310
        %v1607 = vpack.c.b16 %v1315, %v1311
        %v1608 = vpack.c.b16 %v1320, %v1316
        %v1609 = vpack.c.b16 %v1321, %v1317
        %v1610 = vpack.c.b16 %v1322, %v1318
        %v1611 = vpack.c.b16 %v1323, %v1319
        %v1612 = vpack.c.b16 %v1328, %v1324
        %v1613 = vpack.c.b16 %v1329, %v1325
        %v1614 = vpack.c.b16 %v1330, %v1326
        %v1615 = vpack.c.b16 %v1331, %v1327
        %v1616 = vpack.c.b16 %v1336, %v1332
        %v1617 = vpack.c.b16 %v1337, %v1333
        %v1618 = vpack.c.b16 %v1338, %v1334
        %v1619 = vpack.c.b16 %v1339, %v1335
        %v1620 = vpack.c.b16 %v1344, %v1340
        %v1621 = vpack.c.b16 %v1345, %v1341
        %v1622 = vpack.c.b16 %v1346, %v1342
        %v1623 = vpack.c.b16 %v1347, %v1343
        %v1624 = vpack.c.b16 %v1352, %v1348
        %v1625 = vpack.c.b16 %v1353, %v1349
        %v1626 = vpack.c.b16 %v1354, %v1350
        %v1627 = vpack.c.b16 %v1355, %v1351
        %v1628 = vpack.c.b16 %v1360, %v1356
        %v1629 = vpack.c.b16 %v1361, %v1357
        %v1630 = vpack.c.b16 %v1362, %v1358
        %v1631 = vpack.c.b16 %v1363, %v1359
        %v1632 = vpack.c.b16 %v1368, %v1364
        %v1633 = vpack.c.b16 %v1369, %v1365
        %v1634 = vpack.c.b16 %v1370, %v1366
        %v1635 = vpack.c.b16 %v1371, %v1367
        %v1636 = vpack.c.b16 %v1376, %v1372
        %v1637 = vpack.c.b16 %v1377, %v1373
        %v1638 = vpack.c.b16 %v1378, %v1374
        %v1639 = vpack.c.b16 %v1379, %v1375
        %v1640 = vpack.c.b16 %v1384, %v1380
        %v1641 = vpack.c.b16 %v1385, %v1381
        %v1642 = vpack.c.b16 %v1386, %v1382
        %v1643 = vpack.c.b16 %v1387, %v1383
        %1900 = vmatprep.subr.bf16.mxu0 %v1417
        %1901 = vmatpush1.bf16.msra.mxu0 %v1416
        %1902 = vmatprep.subr.bf16.mxu0 %v1413
        %1903 = vmatpush1.bf16.msra.mxu0 %v1412
        %1904 = vmatprep.subr.bf16.mxu0 %v1409
        %1905 = vmatpush1.bf16.msra.mxu0 %v1408
        %1906 = vmatprep.subr.bf16.mxu0 %v1405
        %1907 = vmatpush1.bf16.msra.mxu0 %v1404
        %1908 = vmatprep.subr.bf16.mxu0 %v1401
        %1909 = vmatpush1.bf16.msra.mxu0 %v1400
        %1910 = vmatprep.subr.bf16.mxu0 %v1397
        %1911 = vmatpush1.bf16.msra.mxu0 %v1396
        %1912 = vmatprep.subr.bf16.mxu0 %v1393
        %1913 = vmatpush1.bf16.msra.mxu0 %v1392
        %1914 = vmatprep.subr.bf16.mxu0 %v1389
        %1915 = vmatpush1.bf16.msra.mxu0 %v1388
        %1916 = vmatprep.subr.bf16.mxu0 %v1449
        %1917 = vmatpush2.bf16.msra.mxu0 %v1448
        %1918 = vmatprep.subr.bf16.mxu0 %v1445
        %1919 = vmatpush2.bf16.msra.mxu0 %v1444
        %1920 = vmatprep.subr.bf16.mxu0 %v1441
        %1921 = vmatpush2.bf16.msra.mxu0 %v1440
        %1922 = vmatprep.subr.bf16.mxu0 %v1437
        %1923 = vmatpush2.bf16.msra.mxu0 %v1436
        %1924 = vmatprep.subr.bf16.mxu0 %v1433
        %1925 = vmatpush2.bf16.msra.mxu0 %v1432
        %1926 = vmatprep.subr.bf16.mxu0 %v1429
        %1927 = vmatpush2.bf16.msra.mxu0 %v1428
        %1928 = vmatprep.subr.bf16.mxu0 %v1425
        %1929 = vmatpush2.bf16.msra.mxu0 %v1424
        %1930 = vmatprep.subr.bf16.mxu0 %v1421
        %1931 = vmatpush2.bf16.msra.mxu0 %v1420
        %1932 = vmatprep.mubr.bf16.mxu0 %v605
        %1933 = vmatmul.mubr.bf16.gmra.mxu0 %v604
        %v1934 = vpop.f32.mrf.mxu0
        %v1935 = vadd.f32 %v575, %v1934
        %v1936 = vpop.f32.mrf.mxu0
        %v1937 = vadd.f32 %v579, %v1936
        %v1938 = vpop.f32.mrf.mxu0
        %v1939 = vpop.f32.mrf.mxu0
        %1940 = vdwg.mxu0
        %1941 = vmatprep.subr.bf16.mxu0 %v1481
        %1942 = vmatpush1.bf16.msra.mxu0 %v1480
        %1943 = vmatprep.subr.bf16.mxu0 %v1477
        %1944 = vmatpush1.bf16.msra.mxu0 %v1476
        %1945 = vmatprep.subr.bf16.mxu0 %v1473
        %1946 = vmatpush1.bf16.msra.mxu0 %v1472
        %1947 = vmatprep.subr.bf16.mxu0 %v1469
        %1948 = vmatpush1.bf16.msra.mxu0 %v1468
        %1949 = vmatprep.subr.bf16.mxu0 %v1465
        %1950 = vmatpush1.bf16.msra.mxu0 %v1464
        %1951 = vmatprep.subr.bf16.mxu0 %v1461
        %1952 = vmatpush1.bf16.msra.mxu0 %v1460
        %1953 = vmatprep.subr.bf16.mxu0 %v1457
        %1954 = vmatpush1.bf16.msra.mxu0 %v1456
        %1955 = vmatprep.subr.bf16.mxu0 %v1453
        %1956 = vmatpush1.bf16.msra.mxu0 %v1452
        %1957 = vmatprep.subr.bf16.mxu0 %v1513
        %1958 = vmatpush2.bf16.msra.mxu0 %v1512
        %1959 = vmatprep.subr.bf16.mxu0 %v1509
        %1960 = vmatpush2.bf16.msra.mxu0 %v1508
        %1961 = vmatprep.subr.bf16.mxu0 %v1505
        %1962 = vmatpush2.bf16.msra.mxu0 %v1504
        %1963 = vmatprep.subr.bf16.mxu0 %v1501
        %1964 = vmatpush2.bf16.msra.mxu0 %v1500
        %1965 = vmatprep.subr.bf16.mxu0 %v1497
        %1966 = vmatpush2.bf16.msra.mxu0 %v1496
        %1967 = vmatprep.subr.bf16.mxu0 %v1493
        %1968 = vmatpush2.bf16.msra.mxu0 %v1492
        %1969 = vmatprep.subr.bf16.mxu0 %v1489
        %1970 = vmatpush2.bf16.msra.mxu0 %v1488
        %1971 = vmatprep.subr.bf16.mxu0 %v1485
        %1972 = vmatpush2.bf16.msra.mxu0 %v1484
        %1973 = vmatprep.mubr.bf16.mxu0 %v607
        %1974 = vmatmul.mubr.bf16.gmra.mxu0 %v606
        %v1975 = vpop.f32.mrf.mxu0
        %v1976 = vadd.f32 %v1935, %v1975
        %v1977 = vpop.f32.mrf.mxu0
        %v1978 = vadd.f32 %v1937, %v1977
        %v1979 = vpop.f32.mrf.mxu0
        %v1980 = vpop.f32.mrf.mxu0
        %1981 = vdwg.mxu0
        %1982 = vmatprep.subr.bf16.mxu0 %v1545
        %1983 = vmatpush1.bf16.msra.mxu0 %v1544
        %1984 = vmatprep.subr.bf16.mxu0 %v1541
        %1985 = vmatpush1.bf16.msra.mxu0 %v1540
        %1986 = vmatprep.subr.bf16.mxu0 %v1537
        %1987 = vmatpush1.bf16.msra.mxu0 %v1536
        %1988 = vmatprep.subr.bf16.mxu0 %v1533
        %1989 = vmatpush1.bf16.msra.mxu0 %v1532
        %1990 = vmatprep.subr.bf16.mxu0 %v1529
        %1991 = vmatpush1.bf16.msra.mxu0 %v1528
        %1992 = vmatprep.subr.bf16.mxu0 %v1525
        %1993 = vmatpush1.bf16.msra.mxu0 %v1524
        %1994 = vmatprep.subr.bf16.mxu0 %v1521
        %1995 = vmatpush1.bf16.msra.mxu0 %v1520
        %1996 = vmatprep.subr.bf16.mxu0 %v1517
        %1997 = vmatpush1.bf16.msra.mxu0 %v1516
        %1998 = vmatprep.subr.bf16.mxu0 %v1577
        %1999 = vmatpush2.bf16.msra.mxu0 %v1576
        %2000 = vmatprep.subr.bf16.mxu0 %v1573
        %2001 = vmatpush2.bf16.msra.mxu0 %v1572
        %2002 = vmatprep.subr.bf16.mxu0 %v1569
        %2003 = vmatpush2.bf16.msra.mxu0 %v1568
        %2004 = vmatprep.subr.bf16.mxu0 %v1565
        %2005 = vmatpush2.bf16.msra.mxu0 %v1564
        %2006 = vmatprep.subr.bf16.mxu0 %v1561
        %2007 = vmatpush2.bf16.msra.mxu0 %v1560
        %2008 = vmatprep.subr.bf16.mxu0 %v1557
        %2009 = vmatpush2.bf16.msra.mxu0 %v1556
        %2010 = vmatprep.subr.bf16.mxu0 %v1553
        %2011 = vmatpush2.bf16.msra.mxu0 %v1552
        %2012 = vmatprep.subr.bf16.mxu0 %v1549
        %2013 = vmatpush2.bf16.msra.mxu0 %v1548
        %2014 = vmatprep.mubr.bf16.mxu0 %v609
        %2015 = vmatmul.mubr.bf16.gmra.mxu0 %v608
        %v2016 = vpop.f32.mrf.mxu0
        %v2017 = vadd.f32 %v1976, %v2016
        %v2018 = vpop.f32.mrf.mxu0
        %v2019 = vadd.f32 %v1978, %v2018
        %v2020 = vpop.f32.mrf.mxu0
        %v2021 = vpop.f32.mrf.mxu0
        %2022 = vdwg.mxu0
        %2023 = vmatprep.subr.bf16.mxu0 %v1609
        %2024 = vmatpush1.bf16.msra.mxu0 %v1608
        %2025 = vmatprep.subr.bf16.mxu0 %v1605
        %2026 = vmatpush1.bf16.msra.mxu0 %v1604
        %2027 = vmatprep.subr.bf16.mxu0 %v1601
        %2028 = vmatpush1.bf16.msra.mxu0 %v1600
        %2029 = vmatprep.subr.bf16.mxu0 %v1597
        %2030 = vmatpush1.bf16.msra.mxu0 %v1596
        %2031 = vmatprep.subr.bf16.mxu0 %v1593
        %2032 = vmatpush1.bf16.msra.mxu0 %v1592
        %2033 = vmatprep.subr.bf16.mxu0 %v1589
        %2034 = vmatpush1.bf16.msra.mxu0 %v1588
        %2035 = vmatprep.subr.bf16.mxu0 %v1585
        %2036 = vmatpush1.bf16.msra.mxu0 %v1584
        %2037 = vmatprep.subr.bf16.mxu0 %v1581
        %2038 = vmatpush1.bf16.msra.mxu0 %v1580
        %2039 = vmatprep.subr.bf16.mxu0 %v1641
        %2040 = vmatpush2.bf16.msra.mxu0 %v1640
        %2041 = vmatprep.subr.bf16.mxu0 %v1637
        %2042 = vmatpush2.bf16.msra.mxu0 %v1636
        %2043 = vmatprep.subr.bf16.mxu0 %v1633
        %2044 = vmatpush2.bf16.msra.mxu0 %v1632
        %2045 = vmatprep.subr.bf16.mxu0 %v1629
        %2046 = vmatpush2.bf16.msra.mxu0 %v1628
        %2047 = vmatprep.subr.bf16.mxu0 %v1625
        %2048 = vmatpush2.bf16.msra.mxu0 %v1624
        %2049 = vmatprep.subr.bf16.mxu0 %v1621
        %2050 = vmatpush2.bf16.msra.mxu0 %v1620
        %2051 = vmatprep.subr.bf16.mxu0 %v1617
        %2052 = vmatpush2.bf16.msra.mxu0 %v1616
        %2053 = vmatprep.subr.bf16.mxu0 %v1613
        %2054 = vmatpush2.bf16.msra.mxu0 %v1612
        %2055 = vmatprep.mubr.bf16.mxu0 %v611
        %2056 = vmatmul.mubr.bf16.gmra.mxu0 %v610
        %v2057 = vpop.f32.mrf.mxu0
        %v2058 = vadd.f32 %v2017, %v2057
        %v2059 = vpop.f32.mrf.mxu0
        %v2060 = vadd.f32 %v2019, %v2059
        %v2061 = vpop.f32.mrf.mxu0
        %v2062 = vpop.f32.mrf.mxu0
        %2063 = vdwg.mxu0
        %2064 = vmatprep.subr.bf16.mxu0 %v1419
        %2065 = vmatpush1.bf16.msra.mxu0 %v1418
        %2066 = vmatprep.subr.bf16.mxu0 %v1415
        %2067 = vmatpush1.bf16.msra.mxu0 %v1414
        %2068 = vmatprep.subr.bf16.mxu0 %v1411
        %2069 = vmatpush1.bf16.msra.mxu0 %v1410
        %2070 = vmatprep.subr.bf16.mxu0 %v1407
        %2071 = vmatpush1.bf16.msra.mxu0 %v1406
        %2072 = vmatprep.subr.bf16.mxu0 %v1403
        %2073 = vmatpush1.bf16.msra.mxu0 %v1402
        %2074 = vmatprep.subr.bf16.mxu0 %v1399
        %2075 = vmatpush1.bf16.msra.mxu0 %v1398
        %2076 = vmatprep.subr.bf16.mxu0 %v1395
        %2077 = vmatpush1.bf16.msra.mxu0 %v1394
        %2078 = vmatprep.subr.bf16.mxu0 %v1391
        %2079 = vmatpush1.bf16.msra.mxu0 %v1390
        %2080 = vmatprep.subr.bf16.mxu0 %v1451
        %2081 = vmatpush2.bf16.msra.mxu0 %v1450
        %2082 = vmatprep.subr.bf16.mxu0 %v1447
        %2083 = vmatpush2.bf16.msra.mxu0 %v1446
        %2084 = vmatprep.subr.bf16.mxu0 %v1443
        %2085 = vmatpush2.bf16.msra.mxu0 %v1442
        %2086 = vmatprep.subr.bf16.mxu0 %v1439
        %2087 = vmatpush2.bf16.msra.mxu0 %v1438
        %2088 = vmatprep.subr.bf16.mxu0 %v1435
        %2089 = vmatpush2.bf16.msra.mxu0 %v1434
        %2090 = vmatprep.subr.bf16.mxu0 %v1431
        %2091 = vmatpush2.bf16.msra.mxu0 %v1430
        %2092 = vmatprep.subr.bf16.mxu0 %v1427
        %2093 = vmatpush2.bf16.msra.mxu0 %v1426
        %2094 = vmatprep.subr.bf16.mxu0 %v1423
        %2095 = vmatpush2.bf16.msra.mxu0 %v1422
        %2096 = vmatprep.mubr.bf16.mxu0 %v605
        %2097 = vmatmul.mubr.bf16.gmra.mxu0 %v604
        %v2098 = vpop.f32.mrf.mxu0
        %v2099 = vadd.f32 %v583, %v2098
        %v2100 = vpop.f32.mrf.mxu0
        %v2101 = vadd.f32 %v587, %v2100
        %v2102 = vpop.f32.mrf.mxu0
        %v2103 = vpop.f32.mrf.mxu0
        %2104 = vdwg.mxu0
        %2105 = vmatprep.subr.bf16.mxu0 %v1483
        %2106 = vmatpush1.bf16.msra.mxu0 %v1482
        %2107 = vmatprep.subr.bf16.mxu0 %v1479
        %2108 = vmatpush1.bf16.msra.mxu0 %v1478
        %2109 = vmatprep.subr.bf16.mxu0 %v1475
        %2110 = vmatpush1.bf16.msra.mxu0 %v1474
        %2111 = vmatprep.subr.bf16.mxu0 %v1471
        %2112 = vmatpush1.bf16.msra.mxu0 %v1470
        %2113 = vmatprep.subr.bf16.mxu0 %v1467
        %2114 = vmatpush1.bf16.msra.mxu0 %v1466
        %2115 = vmatprep.subr.bf16.mxu0 %v1463
        %2116 = vmatpush1.bf16.msra.mxu0 %v1462
        %2117 = vmatprep.subr.bf16.mxu0 %v1459
        %2118 = vmatpush1.bf16.msra.mxu0 %v1458
        %2119 = vmatprep.subr.bf16.mxu0 %v1455
        %2120 = vmatpush1.bf16.msra.mxu0 %v1454
        %2121 = vmatprep.subr.bf16.mxu0 %v1515
        %2122 = vmatpush2.bf16.msra.mxu0 %v1514
        %2123 = vmatprep.subr.bf16.mxu0 %v1511
        %2124 = vmatpush2.bf16.msra.mxu0 %v1510
        %2125 = vmatprep.subr.bf16.mxu0 %v1507
        %2126 = vmatpush2.bf16.msra.mxu0 %v1506
        %2127 = vmatprep.subr.bf16.mxu0 %v1503
        %2128 = vmatpush2.bf16.msra.mxu0 %v1502
        %2129 = vmatprep.subr.bf16.mxu0 %v1499
        %2130 = vmatpush2.bf16.msra.mxu0 %v1498
        %2131 = vmatprep.subr.bf16.mxu0 %v1495
        %2132 = vmatpush2.bf16.msra.mxu0 %v1494
        %2133 = vmatprep.subr.bf16.mxu0 %v1491
        %2134 = vmatpush2.bf16.msra.mxu0 %v1490
        %2135 = vmatprep.subr.bf16.mxu0 %v1487
        %2136 = vmatpush2.bf16.msra.mxu0 %v1486
        %2137 = vmatprep.mubr.bf16.mxu0 %v607
        %2138 = vmatmul.mubr.bf16.gmra.mxu0 %v606
        %v2139 = vpop.f32.mrf.mxu0
        %v2140 = vadd.f32 %v2099, %v2139
        %v2141 = vpop.f32.mrf.mxu0
        %v2142 = vadd.f32 %v2101, %v2141
        %v2143 = vpop.f32.mrf.mxu0
        %v2144 = vpop.f32.mrf.mxu0
        %2145 = vdwg.mxu0
        %2146 = vmatprep.subr.bf16.mxu0 %v1547
        %2147 = vmatpush1.bf16.msra.mxu0 %v1546
        %2148 = vmatprep.subr.bf16.mxu0 %v1543
        %2149 = vmatpush1.bf16.msra.mxu0 %v1542
        %2150 = vmatprep.subr.bf16.mxu0 %v1539
        %2151 = vmatpush1.bf16.msra.mxu0 %v1538
        %2152 = vmatprep.subr.bf16.mxu0 %v1535
        %2153 = vmatpush1.bf16.msra.mxu0 %v1534
        %2154 = vmatprep.subr.bf16.mxu0 %v1531
        %2155 = vmatpush1.bf16.msra.mxu0 %v1530
        %2156 = vmatprep.subr.bf16.mxu0 %v1527
        %2157 = vmatpush1.bf16.msra.mxu0 %v1526
        %2158 = vmatprep.subr.bf16.mxu0 %v1523
        %2159 = vmatpush1.bf16.msra.mxu0 %v1522
        %2160 = vmatprep.subr.bf16.mxu0 %v1519
        %2161 = vmatpush1.bf16.msra.mxu0 %v1518
        %2162 = vmatprep.subr.bf16.mxu0 %v1579
        %2163 = vmatpush2.bf16.msra.mxu0 %v1578
        %2164 = vmatprep.subr.bf16.mxu0 %v1575
        %2165 = vmatpush2.bf16.msra.mxu0 %v1574
        %2166 = vmatprep.subr.bf16.mxu0 %v1571
        %2167 = vmatpush2.bf16.msra.mxu0 %v1570
        %2168 = vmatprep.subr.bf16.mxu0 %v1567
        %2169 = vmatpush2.bf16.msra.mxu0 %v1566
        %2170 = vmatprep.subr.bf16.mxu0 %v1563
        %2171 = vmatpush2.bf16.msra.mxu0 %v1562
        %2172 = vmatprep.subr.bf16.mxu0 %v1559
        %2173 = vmatpush2.bf16.msra.mxu0 %v1558
        %2174 = vmatprep.subr.bf16.mxu0 %v1555
        %2175 = vmatpush2.bf16.msra.mxu0 %v1554
        %2176 = vmatprep.subr.bf16.mxu0 %v1551
        %2177 = vmatpush2.bf16.msra.mxu0 %v1550
        %2178 = vmatprep.mubr.bf16.mxu0 %v609
        %2179 = vmatmul.mubr.bf16.gmra.mxu0 %v608
        %v2180 = vpop.f32.mrf.mxu0
        %v2181 = vadd.f32 %v2140, %v2180
        %v2182 = vpop.f32.mrf.mxu0
        %v2183 = vadd.f32 %v2142, %v2182
        %v2184 = vpop.f32.mrf.mxu0
        %v2185 = vpop.f32.mrf.mxu0
        %2186 = vdwg.mxu0
        %2187 = vmatprep.subr.bf16.mxu0 %v1611
        %2188 = vmatpush1.bf16.msra.mxu0 %v1610
        %2189 = vmatprep.subr.bf16.mxu0 %v1607
        %2190 = vmatpush1.bf16.msra.mxu0 %v1606
        %2191 = vmatprep.subr.bf16.mxu0 %v1603
        %2192 = vmatpush1.bf16.msra.mxu0 %v1602
        %2193 = vmatprep.subr.bf16.mxu0 %v1599
        %2194 = vmatpush1.bf16.msra.mxu0 %v1598
        %2195 = vmatprep.subr.bf16.mxu0 %v1595
        %2196 = vmatpush1.bf16.msra.mxu0 %v1594
        %2197 = vmatprep.subr.bf16.mxu0 %v1591
        %2198 = vmatpush1.bf16.msra.mxu0 %v1590
        %2199 = vmatprep.subr.bf16.mxu0 %v1587
        %2200 = vmatpush1.bf16.msra.mxu0 %v1586
        %2201 = vmatprep.subr.bf16.mxu0 %v1583
        %2202 = vmatpush1.bf16.msra.mxu0 %v1582
        %2203 = vmatprep.subr.bf16.mxu0 %v1643
        %2204 = vmatpush2.bf16.msra.mxu0 %v1642
        %2205 = vmatprep.subr.bf16.mxu0 %v1639
        %2206 = vmatpush2.bf16.msra.mxu0 %v1638
        %2207 = vmatprep.subr.bf16.mxu0 %v1635
        %2208 = vmatpush2.bf16.msra.mxu0 %v1634
        %2209 = vmatprep.subr.bf16.mxu0 %v1631
        %2210 = vmatpush2.bf16.msra.mxu0 %v1630
        %2211 = vmatprep.subr.bf16.mxu0 %v1627
        %2212 = vmatpush2.bf16.msra.mxu0 %v1626
        %2213 = vmatprep.subr.bf16.mxu0 %v1623
        %2214 = vmatpush2.bf16.msra.mxu0 %v1622
        %2215 = vmatprep.subr.bf16.mxu0 %v1619
        %2216 = vmatpush2.bf16.msra.mxu0 %v1618
        %2217 = vmatprep.subr.bf16.mxu0 %v1615
        %2218 = vmatpush2.bf16.msra.mxu0 %v1614
        %2219 = vmatprep.mubr.bf16.mxu0 %v611
        %2220 = vmatmul.mubr.bf16.gmra.mxu0 %v610
        %v2221 = vpop.f32.mrf.mxu0
        %v2222 = vadd.f32 %v2181, %v2221
        %v2223 = vpop.f32.mrf.mxu0
        %v2224 = vadd.f32 %v2183, %v2223
        %v2225 = vpop.f32.mrf.mxu0
        %v2226 = vpop.f32.mrf.mxu0
        %2227 = vdwg.mxu0
        %v2228 = vmax.f32 %v2058, 0.0
        %v2229 = vmax.f32 %v2060, 0.0
        %v2230 = vmax.f32 %v2222, 0.0
        %v2231 = vmax.f32 %v2224, 0.0
        %v2232 = vpack.c.bf16 %v2228, %v2228
        %v2233 = vpack.c.bf16 %v2229, %v2229
        %v2234 = vpack.c.bf16 %v2230, %v2230
        %v2235 = vpack.c.bf16 %v2231, %v2231
        %v2236 = vld [vmem:[#allocation2] sm:$0xf]
        %v2237 = vld [vmem:[#allocation2 + $0x4] sm:$0xf]
        %v2238 = vld [vmem:[#allocation2 + $0x8] sm:$0xf]
        %v2239 = vld [vmem:[#allocation2 + $0xc] sm:$0xf]
        %v2240 = vld [vmem:[#allocation2 + $0x10] sm:$0xf]
        %v2241 = vld [vmem:[#allocation2 + $0x14] sm:$0xf]
        %v2242 = vld [vmem:[#allocation2 + $0x18] sm:$0xf]
        %v2243 = vld [vmem:[#allocation2 + $0x1c] sm:$0xf]
        %v2244 = vld [vmem:[#allocation2 + $0x20] sm:$0xf]
        %v2245 = vld [vmem:[#allocation2 + $0x24] sm:$0xf]
        %v2246 = vld [vmem:[#allocation2 + $0x28] sm:$0xf]
        %v2247 = vld [vmem:[#allocation2 + $0x2c] sm:$0xf]
        %v2248 = vld [vmem:[#allocation2 + $0x30] sm:$0xf]
        %v2249 = vld [vmem:[#allocation2 + $0x34] sm:$0xf]
        %v2250 = vld [vmem:[#allocation2 + $0x38] sm:$0xf]
        %v2251 = vld [vmem:[#allocation2 + $0x3c] sm:$0xf]
        %v2252 = vld [vmem:[#allocation2 + $0x40] sm:$0xf]
        %v2253 = vld [vmem:[#allocation2 + $0x44] sm:$0xf]
        %v2254 = vld [vmem:[#allocation2 + $0x48] sm:$0xf]
        %v2255 = vld [vmem:[#allocation2 + $0x4c] sm:$0xf]
        %v2256 = vld [vmem:[#allocation2 + $0x50] sm:$0xf]
        %v2257 = vld [vmem:[#allocation2 + $0x54] sm:$0xf]
        %v2258 = vld [vmem:[#allocation2 + $0x58] sm:$0xf]
        %v2259 = vld [vmem:[#allocation2 + $0x5c] sm:$0xf]
        %v2260 = vld [vmem:[#allocation2 + $0x60] sm:$0xf]
        %v2261 = vld [vmem:[#allocation2 + $0x64] sm:$0xf]
        %v2262 = vld [vmem:[#allocation2 + $0x68] sm:$0xf]
        %v2263 = vld [vmem:[#allocation2 + $0x6c] sm:$0xf]
        %v2264 = vld [vmem:[#allocation2 + $0x70] sm:$0xf]
        %v2265 = vld [vmem:[#allocation2 + $0x74] sm:$0xf]
        %v2266 = vld [vmem:[#allocation2 + $0x78] sm:$0xf]
        %v2267 = vld [vmem:[#allocation2 + $0x7c] sm:$0xf]
        %v2268 = vld [vmem:[#allocation2 + $0x80] sm:$0xf]
        %v2269 = vld [vmem:[#allocation2 + $0x84] sm:$0xf]
        %v2270 = vld [vmem:[#allocation2 + $0x88] sm:$0xf]
        %v2271 = vld [vmem:[#allocation2 + $0x8c] sm:$0xf]
        %v2272 = vld [vmem:[#allocation2 + $0x90] sm:$0xf]
        %v2273 = vld [vmem:[#allocation2 + $0x94] sm:$0xf]
        %v2274 = vld [vmem:[#allocation2 + $0x98] sm:$0xf]
        %v2275 = vld [vmem:[#allocation2 + $0x9c] sm:$0xf]
        %v2276 = vld [vmem:[#allocation2 + $0xa0] sm:$0xf]
        %v2277 = vld [vmem:[#allocation2 + $0xa4] sm:$0xf]
        %v2278 = vld [vmem:[#allocation2 + $0xa8] sm:$0xf]
        %v2279 = vld [vmem:[#allocation2 + $0xac] sm:$0xf]
        %v2280 = vld [vmem:[#allocation2 + $0xb0] sm:$0xf]
        %v2281 = vld [vmem:[#allocation2 + $0xb4] sm:$0xf]
        %v2282 = vld [vmem:[#allocation2 + $0xb8] sm:$0xf]
        %v2283 = vld [vmem:[#allocation2 + $0xbc] sm:$0xf]
        %v2284 = vld [vmem:[#allocation2 + $0xc0] sm:$0xf]
        %v2285 = vld [vmem:[#allocation2 + $0xc4] sm:$0xf]
        %v2286 = vld [vmem:[#allocation2 + $0xc8] sm:$0xf]
        %v2287 = vld [vmem:[#allocation2 + $0xcc] sm:$0xf]
        %v2288 = vld [vmem:[#allocation2 + $0xd0] sm:$0xf]
        %v2289 = vld [vmem:[#allocation2 + $0xd4] sm:$0xf]
        %v2290 = vld [vmem:[#allocation2 + $0xd8] sm:$0xf]
        %v2291 = vld [vmem:[#allocation2 + $0xdc] sm:$0xf]
        %v2292 = vld [vmem:[#allocation2 + $0xe0] sm:$0xf]
        %v2293 = vld [vmem:[#allocation2 + $0xe4] sm:$0xf]
        %v2294 = vld [vmem:[#allocation2 + $0xe8] sm:$0xf]
        %v2295 = vld [vmem:[#allocation2 + $0xec] sm:$0xf]
        %v2296 = vld [vmem:[#allocation2 + $0xf0] sm:$0xf]
        %v2297 = vld [vmem:[#allocation2 + $0xf4] sm:$0xf]
        %v2298 = vld [vmem:[#allocation2 + $0xf8] sm:$0xf]
        %v2299 = vld [vmem:[#allocation2 + $0xfc] sm:$0xf]
        %v2300 = vld [vmem:[%s4] sm:$0x1]
        %v2302 = vlaneseq
        %v2303 = vshrl.u32 %v2302, 7
        %v2304 = vsub.s32 0, %v2303
        %v2305 = vrot.slane %v2300, %v2304
        %v2371 = vunpack.c.l.b16 %v2236
        %v2372 = vunpack.c.l.b16 %v2237
        %v2373 = vunpack.c.l.b16 %v2238
        %v2374 = vunpack.c.l.b16 %v2239
        %v2375 = vunpack.c.l.b16 %v2240
        %v2376 = vunpack.c.l.b16 %v2241
        %v2377 = vunpack.c.l.b16 %v2242
        %v2378 = vunpack.c.l.b16 %v2243
        %v2379 = vunpack.c.l.b16 %v2244
        %v2380 = vunpack.c.l.b16 %v2245
        %v2381 = vunpack.c.l.b16 %v2246
        %v2382 = vunpack.c.l.b16 %v2247
        %v2383 = vunpack.c.l.b16 %v2248
        %v2384 = vunpack.c.l.b16 %v2249
        %v2385 = vunpack.c.l.b16 %v2250
        %v2386 = vunpack.c.l.b16 %v2251
        %v2387 = vunpack.c.l.b16 %v2252
        %v2388 = vunpack.c.l.b16 %v2253
        %v2389 = vunpack.c.l.b16 %v2254
        %v2390 = vunpack.c.l.b16 %v2255
        %v2391 = vunpack.c.l.b16 %v2256
        %v2392 = vunpack.c.l.b16 %v2257
        %v2393 = vunpack.c.l.b16 %v2258
        %v2394 = vunpack.c.l.b16 %v2259
        %v2395 = vunpack.c.l.b16 %v2260
        %v2396 = vunpack.c.l.b16 %v2261
        %v2397 = vunpack.c.l.b16 %v2262
        %v2398 = vunpack.c.l.b16 %v2263
        %v2399 = vunpack.c.l.b16 %v2264
        %v2400 = vunpack.c.l.b16 %v2265
        %v2401 = vunpack.c.l.b16 %v2266
        %v2402 = vunpack.c.l.b16 %v2267
        %v2403 = vunpack.c.l.b16 %v2268
        %v2404 = vunpack.c.l.b16 %v2269
        %v2405 = vunpack.c.l.b16 %v2270
        %v2406 = vunpack.c.l.b16 %v2271
        %v2407 = vunpack.c.l.b16 %v2272
        %v2408 = vunpack.c.l.b16 %v2273
        %v2409 = vunpack.c.l.b16 %v2274
        %v2410 = vunpack.c.l.b16 %v2275
        %v2411 = vunpack.c.l.b16 %v2276
        %v2412 = vunpack.c.l.b16 %v2277
        %v2413 = vunpack.c.l.b16 %v2278
        %v2414 = vunpack.c.l.b16 %v2279
        %v2415 = vunpack.c.l.b16 %v2280
        %v2416 = vunpack.c.l.b16 %v2281
        %v2417 = vunpack.c.l.b16 %v2282
        %v2418 = vunpack.c.l.b16 %v2283
        %v2419 = vunpack.c.l.b16 %v2284
        %v2420 = vunpack.c.l.b16 %v2285
        %v2421 = vunpack.c.l.b16 %v2286
        %v2422 = vunpack.c.l.b16 %v2287
        %v2423 = vunpack.c.l.b16 %v2288
        %v2424 = vunpack.c.l.b16 %v2289
        %v2425 = vunpack.c.l.b16 %v2290
        %v2426 = vunpack.c.l.b16 %v2291
        %v2427 = vunpack.c.l.b16 %v2292
        %v2428 = vunpack.c.l.b16 %v2293
        %v2429 = vunpack.c.l.b16 %v2294
        %v2430 = vunpack.c.l.b16 %v2295
        %v2431 = vunpack.c.l.b16 %v2296
        %v2432 = vunpack.c.l.b16 %v2297
        %v2433 = vunpack.c.l.b16 %v2298
        %v2434 = vunpack.c.l.b16 %v2299
        %v2435 = vpack.c.b16 %v2372, %v2371
        %v2436 = vpack.c.b16 %v2374, %v2373
        %v2437 = vpack.c.b16 %v2376, %v2375
        %v2438 = vpack.c.b16 %v2378, %v2377
        %v2439 = vpack.c.b16 %v2380, %v2379
        %v2440 = vpack.c.b16 %v2382, %v2381
        %v2441 = vpack.c.b16 %v2384, %v2383
        %v2442 = vpack.c.b16 %v2386, %v2385
        %v2443 = vpack.c.b16 %v2388, %v2387
        %v2444 = vpack.c.b16 %v2390, %v2389
        %v2445 = vpack.c.b16 %v2392, %v2391
        %v2446 = vpack.c.b16 %v2394, %v2393
        %v2447 = vpack.c.b16 %v2396, %v2395
        %v2448 = vpack.c.b16 %v2398, %v2397
        %v2449 = vpack.c.b16 %v2400, %v2399
        %v2450 = vpack.c.b16 %v2402, %v2401
        %v2451 = vpack.c.b16 %v2404, %v2403
        %v2452 = vpack.c.b16 %v2406, %v2405
        %v2453 = vpack.c.b16 %v2408, %v2407
        %v2454 = vpack.c.b16 %v2410, %v2409
        %v2455 = vpack.c.b16 %v2412, %v2411
        %v2456 = vpack.c.b16 %v2414, %v2413
        %v2457 = vpack.c.b16 %v2416, %v2415
        %v2458 = vpack.c.b16 %v2418, %v2417
        %v2459 = vpack.c.b16 %v2420, %v2419
        %v2460 = vpack.c.b16 %v2422, %v2421
        %v2461 = vpack.c.b16 %v2424, %v2423
        %v2462 = vpack.c.b16 %v2426, %v2425
        %v2463 = vpack.c.b16 %v2428, %v2427
        %v2464 = vpack.c.b16 %v2430, %v2429
        %v2465 = vpack.c.b16 %v2432, %v2431
        %v2466 = vpack.c.b16 %v2434, %v2433
        %2499 = vmatprep.subr.bf16.mxu0 0
        %2500 = vmatpush1.bf16.msra.mxu0 %v2442
        %2501 = vmatprep.subr.bf16.mxu0 0
        %2502 = vmatpush1.bf16.msra.mxu0 %v2441
        %2503 = vmatprep.subr.bf16.mxu0 0
        %2504 = vmatpush1.bf16.msra.mxu0 %v2440
        %2505 = vmatprep.subr.bf16.mxu0 0
        %2506 = vmatpush1.bf16.msra.mxu0 %v2439
        %2507 = vmatprep.subr.bf16.mxu0 0
        %2508 = vmatpush1.bf16.msra.mxu0 %v2438
        %2509 = vmatprep.subr.bf16.mxu0 0
        %2510 = vmatpush1.bf16.msra.mxu0 %v2437
        %2511 = vmatprep.subr.bf16.mxu0 0
        %2512 = vmatpush1.bf16.msra.mxu0 %v2436
        %2513 = vmatprep.subr.bf16.mxu0 0
        %2514 = vmatpush1.bf16.msra.mxu0 %v2435
        %2515 = vmatprep.subr.bf16.mxu0 0
        %2516 = vmatpush2.bf16.msra.mxu0 %v2450
        %2517 = vmatprep.subr.bf16.mxu0 0
        %2518 = vmatpush2.bf16.msra.mxu0 %v2449
        %2519 = vmatprep.subr.bf16.mxu0 0
        %2520 = vmatpush2.bf16.msra.mxu0 %v2448
        %2521 = vmatprep.subr.bf16.mxu0 0
        %2522 = vmatpush2.bf16.msra.mxu0 %v2447
        %2523 = vmatprep.subr.bf16.mxu0 0
        %2524 = vmatpush2.bf16.msra.mxu0 %v2446
        %2525 = vmatprep.subr.bf16.mxu0 0
        %2526 = vmatpush2.bf16.msra.mxu0 %v2445
        %2527 = vmatprep.subr.bf16.mxu0 0
        %2528 = vmatpush2.bf16.msra.mxu0 %v2444
        %2529 = vmatprep.subr.bf16.mxu0 0
        %2530 = vmatpush2.bf16.msra.mxu0 %v2443
        %2531 = vmatprep.mubr.bf16.mxu0 %v2233
        %2532 = vmatmul.mubr.bf16.gmra.mxu0 %v2232
        %v2533 = vpop.f32.mrf.mxu0
        %v2534 = vadd.f32 %v2305, %v2533
        %v2535 = vpop.f32.mrf.mxu0
        %v2536 = vpop.f32.mrf.mxu0
        %v2537 = vpop.f32.mrf.mxu0
        %2538 = vdwg.mxu0
        %2539 = vmatprep.subr.bf16.mxu0 0
        %2540 = vmatpush1.bf16.msra.mxu0 %v2458
        %2541 = vmatprep.subr.bf16.mxu0 0
        %2542 = vmatpush1.bf16.msra.mxu0 %v2457
        %2543 = vmatprep.subr.bf16.mxu0 0
        %2544 = vmatpush1.bf16.msra.mxu0 %v2456
        %2545 = vmatprep.subr.bf16.mxu0 0
        %2546 = vmatpush1.bf16.msra.mxu0 %v2455
        %2547 = vmatprep.subr.bf16.mxu0 0
        %2548 = vmatpush1.bf16.msra.mxu0 %v2454
        %2549 = vmatprep.subr.bf16.mxu0 0
        %2550 = vmatpush1.bf16.msra.mxu0 %v2453
        %2551 = vmatprep.subr.bf16.mxu0 0
        %2552 = vmatpush1.bf16.msra.mxu0 %v2452
        %2553 = vmatprep.subr.bf16.mxu0 0
        %2554 = vmatpush1.bf16.msra.mxu0 %v2451
        %2555 = vmatprep.subr.bf16.mxu0 0
        %2556 = vmatpush2.bf16.msra.mxu0 %v2466
        %2557 = vmatprep.subr.bf16.mxu0 0
        %2558 = vmatpush2.bf16.msra.mxu0 %v2465
        %2559 = vmatprep.subr.bf16.mxu0 0
        %2560 = vmatpush2.bf16.msra.mxu0 %v2464
        %2561 = vmatprep.subr.bf16.mxu0 0
        %2562 = vmatpush2.bf16.msra.mxu0 %v2463
        %2563 = vmatprep.subr.bf16.mxu0 0
        %2564 = vmatpush2.bf16.msra.mxu0 %v2462
        %2565 = vmatprep.subr.bf16.mxu0 0
        %2566 = vmatpush2.bf16.msra.mxu0 %v2461
        %2567 = vmatprep.subr.bf16.mxu0 0
        %2568 = vmatpush2.bf16.msra.mxu0 %v2460
        %2569 = vmatprep.subr.bf16.mxu0 0
        %2570 = vmatpush2.bf16.msra.mxu0 %v2459
        %2571 = vmatprep.mubr.bf16.mxu0 %v2235
        %2572 = vmatmul.mubr.bf16.gmra.mxu0 %v2234
        %v2573 = vpop.f32.mrf.mxu0
        %v2574 = vadd.f32 %v2534, %v2573
        %v2575 = vpop.f32.mrf.mxu0
        %v2576 = vpop.f32.mrf.mxu0
        %v2577 = vpop.f32.mrf.mxu0
        %2578 = vdwg.mxu0
        %v2579 = vmax.f32 %v2574, 0.0
        %v2580 = vpack.c.bf16 %v2579, %v2579
        %v2581 = vld [vmem:[#allocation4] sm:$0xff]
        %v2582 = vld [vmem:[#allocation4 + $0x8] sm:$0xff]
        %v2583 = vld [vmem:[#allocation4 + $0x10] sm:$0xff]
        %v2584 = vld [vmem:[#allocation4 + $0x18] sm:$0xff]
        %v2585 = vld [vmem:[#allocation4 + $0x20] sm:$0xff]
        %v2586 = vld [vmem:[#allocation4 + $0x28] sm:$0xff]
        %v2587 = vld [vmem:[#allocation4 + $0x30] sm:$0xff]
        %v2588 = vld [vmem:[#allocation4 + $0x38] sm:$0xff]
        %v2589 = vld [vmem:[#allocation4 + $0x40] sm:$0xff]
        %v2590 = vld [vmem:[#allocation4 + $0x48] sm:$0xff]
        %v2591 = vld [vmem:[#allocation4 + $0x50] sm:$0xff]
        %v2592 = vld [vmem:[#allocation4 + $0x58] sm:$0xff]
        %v2593 = vld [vmem:[#allocation4 + $0x60] sm:$0xff]
        %v2594 = vld [vmem:[#allocation4 + $0x68] sm:$0xff]
        %v2595 = vld [vmem:[#allocation4 + $0x70] sm:$0xff]
        %v2596 = vld [vmem:[#allocation4 + $0x78] sm:$0xff]
        %v2597 = vld [vmem:[#allocation4 + $0x80] sm:$0xff]
        %v2598 = vld [vmem:[#allocation4 + $0x88] sm:$0xff]
        %v2599 = vld [vmem:[#allocation4 + $0x90] sm:$0xff]
        %v2600 = vld [vmem:[#allocation4 + $0x98] sm:$0xff]
        %v2601 = vld [vmem:[#allocation4 + $0xa0] sm:$0xff]
        %v2602 = vld [vmem:[#allocation4 + $0xa8] sm:$0xff]
        %v2603 = vld [vmem:[#allocation4 + $0xb0] sm:$0xff]
        %v2604 = vld [vmem:[#allocation4 + $0xb8] sm:$0xff]
        %v2605 = vld [vmem:[#allocation4 + $0xc0] sm:$0xff]
        %v2606 = vld [vmem:[#allocation4 + $0xc8] sm:$0xff]
        %v2607 = vld [vmem:[#allocation4 + $0xd0] sm:$0xff]
        %v2608 = vld [vmem:[#allocation4 + $0xd8] sm:$0xff]
        %v2609 = vld [vmem:[#allocation4 + $0xe0] sm:$0xff]
        %v2610 = vld [vmem:[#allocation4 + $0xe8] sm:$0xff]
        %v2611 = vld [vmem:[#allocation4 + $0xf0] sm:$0xff]
        %v2612 = vld [vmem:[#allocation4 + $0xf8] sm:$0xff]
        %v2613 = vld [vmem:[#allocation4 + $0x100] sm:$0xff]
        %v2614 = vld [vmem:[#allocation4 + $0x108] sm:$0xff]
        %v2615 = vld [vmem:[#allocation4 + $0x110] sm:$0xff]
        %v2616 = vld [vmem:[#allocation4 + $0x118] sm:$0xff]
        %v2617 = vld [vmem:[#allocation4 + $0x120] sm:$0xff]
        %v2618 = vld [vmem:[#allocation4 + $0x128] sm:$0xff]
        %v2619 = vld [vmem:[#allocation4 + $0x130] sm:$0xff]
        %v2620 = vld [vmem:[#allocation4 + $0x138] sm:$0xff]
        %v2621 = vld [vmem:[#allocation4 + $0x140] sm:$0xff]
        %v2622 = vld [vmem:[#allocation4 + $0x148] sm:$0xff]
        %v2623 = vld [vmem:[#allocation4 + $0x150] sm:$0xff]
        %v2624 = vld [vmem:[#allocation4 + $0x158] sm:$0xff]
        %v2625 = vld [vmem:[#allocation4 + $0x160] sm:$0xff]
        %v2626 = vld [vmem:[#allocation4 + $0x168] sm:$0xff]
        %v2627 = vld [vmem:[#allocation4 + $0x170] sm:$0xff]
        %v2628 = vld [vmem:[#allocation4 + $0x178] sm:$0xff]
        %v2629 = vld [vmem:[#allocation4 + $0x180] sm:$0xff]
        %v2630 = vld [vmem:[#allocation4 + $0x188] sm:$0xff]
        %v2631 = vld [vmem:[#allocation4 + $0x190] sm:$0xff]
        %v2632 = vld [vmem:[#allocation4 + $0x198] sm:$0xff]
        %v2633 = vld [vmem:[#allocation4 + $0x1a0] sm:$0xff]
        %v2634 = vld [vmem:[#allocation4 + $0x1a8] sm:$0xff]
        %v2635 = vld [vmem:[#allocation4 + $0x1b0] sm:$0xff]
        %v2636 = vld [vmem:[#allocation4 + $0x1b8] sm:$0xff]
        %v2637 = vld [vmem:[#allocation4 + $0x1c0] sm:$0xff]
        %v2638 = vld [vmem:[#allocation4 + $0x1c8] sm:$0xff]
        %v2639 = vld [vmem:[#allocation4 + $0x1d0] sm:$0xff]
        %v2640 = vld [vmem:[#allocation4 + $0x1d8] sm:$0xff]
        %v2641 = vld [vmem:[#allocation4 + $0x1e0] sm:$0xff]
        %v2642 = vld [vmem:[#allocation4 + $0x1e8] sm:$0xff]
        %v2643 = vld [vmem:[#allocation4 + $0x1f0] sm:$0xff]
        %v2644 = vld [vmem:[#allocation4 + $0x1f8] sm:$0xff]
        %v2645 = vld [vmem:[%s6] sm:$0xff]
        %v2647 = vlaneseq
        %v2648 = vshrl.u32 %v2647, 7
        %v2649 = vsub.s32 0, %v2648
        %v2650 = vrot.slane %v2645, %v2649
        %v2651 = vlaneseq
        %v2652 = vshrl.u32 %v2651, 7
        %v2653 = vsub.s32 1, %v2652
        %v2654 = vrot.slane %v2645, %v2653
        %v2655 = vlaneseq
        %v2656 = vshrl.u32 %v2655, 7
        %v2657 = vsub.s32 2, %v2656
        %v2658 = vrot.slane %v2645, %v2657
        %v2659 = vlaneseq
        %v2660 = vshrl.u32 %v2659, 7
        %v2661 = vsub.s32 3, %v2660
        %v2662 = vrot.slane %v2645, %v2661
        %v2663 = vlaneseq
        %v2664 = vshrl.u32 %v2663, 7
        %v2665 = vsub.s32 4, %v2664
        %v2666 = vrot.slane %v2645, %v2665
        %v2667 = vlaneseq
        %v2668 = vshrl.u32 %v2667, 7
        %v2669 = vsub.s32 5, %v2668
        %v2670 = vrot.slane %v2645, %v2669
        %v2671 = vlaneseq
        %v2672 = vshrl.u32 %v2671, 7
        %v2673 = vsub.s32 6, %v2672
        %v2674 = vrot.slane %v2645, %v2673
        %v2675 = vlaneseq
        %v2676 = vshrl.u32 %v2675, 7
        %v2677 = vsub.s32 7, %v2676
        %v2678 = vrot.slane %v2645, %v2677
        %v2751 = vunpack.c.l.b16 %v2581
        %v2752 = vunpack.c.h.b16 %v2581
        %v2753 = vunpack.c.l.b16 %v2582
        %v2754 = vunpack.c.h.b16 %v2582
        %v2755 = vunpack.c.l.b16 %v2583
        %v2756 = vunpack.c.h.b16 %v2583
        %v2757 = vunpack.c.l.b16 %v2584
        %v2758 = vunpack.c.h.b16 %v2584
        %v2759 = vunpack.c.l.b16 %v2585
        %v2760 = vunpack.c.h.b16 %v2585
        %v2761 = vunpack.c.l.b16 %v2586
        %v2762 = vunpack.c.h.b16 %v2586
        %v2763 = vunpack.c.l.b16 %v2587
        %v2764 = vunpack.c.h.b16 %v2587
        %v2765 = vunpack.c.l.b16 %v2588
        %v2766 = vunpack.c.h.b16 %v2588
        %v2767 = vunpack.c.l.b16 %v2589
        %v2768 = vunpack.c.h.b16 %v2589
        %v2769 = vunpack.c.l.b16 %v2590
        %v2770 = vunpack.c.h.b16 %v2590
        %v2771 = vunpack.c.l.b16 %v2591
        %v2772 = vunpack.c.h.b16 %v2591
        %v2773 = vunpack.c.l.b16 %v2592
        %v2774 = vunpack.c.h.b16 %v2592
        %v2775 = vunpack.c.l.b16 %v2593
        %v2776 = vunpack.c.h.b16 %v2593
        %v2777 = vunpack.c.l.b16 %v2594
        %v2778 = vunpack.c.h.b16 %v2594
        %v2779 = vunpack.c.l.b16 %v2595
        %v2780 = vunpack.c.h.b16 %v2595
        %v2781 = vunpack.c.l.b16 %v2596
        %v2782 = vunpack.c.h.b16 %v2596
        %v2783 = vunpack.c.l.b16 %v2597
        %v2784 = vunpack.c.h.b16 %v2597
        %v2785 = vunpack.c.l.b16 %v2598
        %v2786 = vunpack.c.h.b16 %v2598
        %v2787 = vunpack.c.l.b16 %v2599
        %v2788 = vunpack.c.h.b16 %v2599
        %v2789 = vunpack.c.l.b16 %v2600
        %v2790 = vunpack.c.h.b16 %v2600
        %v2791 = vunpack.c.l.b16 %v2601
        %v2792 = vunpack.c.h.b16 %v2601
        %v2793 = vunpack.c.l.b16 %v2602
        %v2794 = vunpack.c.h.b16 %v2602
        %v2795 = vunpack.c.l.b16 %v2603
        %v2796 = vunpack.c.h.b16 %v2603
        %v2797 = vunpack.c.l.b16 %v2604
        %v2798 = vunpack.c.h.b16 %v2604
        %v2799 = vunpack.c.l.b16 %v2605
        %v2800 = vunpack.c.h.b16 %v2605
        %v2801 = vunpack.c.l.b16 %v2606
        %v2802 = vunpack.c.h.b16 %v2606
        %v2803 = vunpack.c.l.b16 %v2607
        %v2804 = vunpack.c.h.b16 %v2607
        %v2805 = vunpack.c.l.b16 %v2608
        %v2806 = vunpack.c.h.b16 %v2608
        %v2807 = vunpack.c.l.b16 %v2609
        %v2808 = vunpack.c.h.b16 %v2609
        %v2809 = vunpack.c.l.b16 %v2610
        %v2810 = vunpack.c.h.b16 %v2610
        %v2811 = vunpack.c.l.b16 %v2611
        %v2812 = vunpack.c.h.b16 %v2611
        %v2813 = vunpack.c.l.b16 %v2612
        %v2814 = vunpack.c.h.b16 %v2612
        %v2815 = vunpack.c.l.b16 %v2613
        %v2816 = vunpack.c.h.b16 %v2613
        %v2817 = vunpack.c.l.b16 %v2614
        %v2818 = vunpack.c.h.b16 %v2614
        %v2819 = vunpack.c.l.b16 %v2615
        %v2820 = vunpack.c.h.b16 %v2615
        %v2821 = vunpack.c.l.b16 %v2616
        %v2822 = vunpack.c.h.b16 %v2616
        %v2823 = vunpack.c.l.b16 %v2617
        %v2824 = vunpack.c.h.b16 %v2617
        %v2825 = vunpack.c.l.b16 %v2618
        %v2826 = vunpack.c.h.b16 %v2618
        %v2827 = vunpack.c.l.b16 %v2619
        %v2828 = vunpack.c.h.b16 %v2619
        %v2829 = vunpack.c.l.b16 %v2620
        %v2830 = vunpack.c.h.b16 %v2620
        %v2831 = vunpack.c.l.b16 %v2621
        %v2832 = vunpack.c.h.b16 %v2621
        %v2833 = vunpack.c.l.b16 %v2622
        %v2834 = vunpack.c.h.b16 %v2622
        %v2835 = vunpack.c.l.b16 %v2623
        %v2836 = vunpack.c.h.b16 %v2623
        %v2837 = vunpack.c.l.b16 %v2624
        %v2838 = vunpack.c.h.b16 %v2624
        %v2839 = vunpack.c.l.b16 %v2625
        %v2840 = vunpack.c.h.b16 %v2625
        %v2841 = vunpack.c.l.b16 %v2626
        %v2842 = vunpack.c.h.b16 %v2626
        %v2843 = vunpack.c.l.b16 %v2627
        %v2844 = vunpack.c.h.b16 %v2627
        %v2845 = vunpack.c.l.b16 %v2628
        %v2846 = vunpack.c.h.b16 %v2628
        %v2847 = vunpack.c.l.b16 %v2629
        %v2848 = vunpack.c.h.b16 %v2629
        %v2849 = vunpack.c.l.b16 %v2630
        %v2850 = vunpack.c.h.b16 %v2630
        %v2851 = vunpack.c.l.b16 %v2631
        %v2852 = vunpack.c.h.b16 %v2631
        %v2853 = vunpack.c.l.b16 %v2632
        %v2854 = vunpack.c.h.b16 %v2632
        %v2855 = vunpack.c.l.b16 %v2633
        %v2856 = vunpack.c.h.b16 %v2633
        %v2857 = vunpack.c.l.b16 %v2634
        %v2858 = vunpack.c.h.b16 %v2634
        %v2859 = vunpack.c.l.b16 %v2635
        %v2860 = vunpack.c.h.b16 %v2635
        %v2861 = vunpack.c.l.b16 %v2636
        %v2862 = vunpack.c.h.b16 %v2636
        %v2863 = vunpack.c.l.b16 %v2637
        %v2864 = vunpack.c.h.b16 %v2637
        %v2865 = vunpack.c.l.b16 %v2638
        %v2866 = vunpack.c.h.b16 %v2638
        %v2867 = vunpack.c.l.b16 %v2639
        %v2868 = vunpack.c.h.b16 %v2639
        %v2869 = vunpack.c.l.b16 %v2640
        %v2870 = vunpack.c.h.b16 %v2640
        %v2871 = vunpack.c.l.b16 %v2641
        %v2872 = vunpack.c.h.b16 %v2641
        %v2873 = vunpack.c.l.b16 %v2642
        %v2874 = vunpack.c.h.b16 %v2642
        %v2875 = vunpack.c.l.b16 %v2643
        %v2876 = vunpack.c.h.b16 %v2643
        %v2877 = vunpack.c.l.b16 %v2644
        %v2878 = vunpack.c.h.b16 %v2644
        %v2879 = vpack.c.b16 %v2759, %v2751
        %v2880 = vpack.c.b16 %v2760, %v2752
        %v2881 = vpack.c.b16 %v2761, %v2753
        %v2882 = vpack.c.b16 %v2762, %v2754
        %v2883 = vpack.c.b16 %v2763, %v2755
        %v2884 = vpack.c.b16 %v2764, %v2756
        %v2885 = vpack.c.b16 %v2765, %v2757
        %v2886 = vpack.c.b16 %v2766, %v2758
        %v2887 = vpack.c.b16 %v2775, %v2767
        %v2888 = vpack.c.b16 %v2776, %v2768
        %v2889 = vpack.c.b16 %v2777, %v2769
        %v2890 = vpack.c.b16 %v2778, %v2770
        %v2891 = vpack.c.b16 %v2779, %v2771
        %v2892 = vpack.c.b16 %v2780, %v2772
        %v2893 = vpack.c.b16 %v2781, %v2773
        %v2894 = vpack.c.b16 %v2782, %v2774
        %v2895 = vpack.c.b16 %v2791, %v2783
        %v2896 = vpack.c.b16 %v2792, %v2784
        %v2897 = vpack.c.b16 %v2793, %v2785
        %v2898 = vpack.c.b16 %v2794, %v2786
        %v2899 = vpack.c.b16 %v2795, %v2787
        %v2900 = vpack.c.b16 %v2796, %v2788
        %v2901 = vpack.c.b16 %v2797, %v2789
        %v2902 = vpack.c.b16 %v2798, %v2790
        %v2903 = vpack.c.b16 %v2807, %v2799
        %v2904 = vpack.c.b16 %v2808, %v2800
        %v2905 = vpack.c.b16 %v2809, %v2801
        %v2906 = vpack.c.b16 %v2810, %v2802
        %v2907 = vpack.c.b16 %v2811, %v2803
        %v2908 = vpack.c.b16 %v2812, %v2804
        %v2909 = vpack.c.b16 %v2813, %v2805
        %v2910 = vpack.c.b16 %v2814, %v2806
        %v2911 = vpack.c.b16 %v2823, %v2815
        %v2912 = vpack.c.b16 %v2824, %v2816
        %v2913 = vpack.c.b16 %v2825, %v2817
        %v2914 = vpack.c.b16 %v2826, %v2818
        %v2915 = vpack.c.b16 %v2827, %v2819
        %v2916 = vpack.c.b16 %v2828, %v2820
        %v2917 = vpack.c.b16 %v2829, %v2821
        %v2918 = vpack.c.b16 %v2830, %v2822
        %v2919 = vpack.c.b16 %v2839, %v2831
        %v2920 = vpack.c.b16 %v2840, %v2832
        %v2921 = vpack.c.b16 %v2841, %v2833
        %v2922 = vpack.c.b16 %v2842, %v2834
        %v2923 = vpack.c.b16 %v2843, %v2835
        %v2924 = vpack.c.b16 %v2844, %v2836
        %v2925 = vpack.c.b16 %v2845, %v2837
        %v2926 = vpack.c.b16 %v2846, %v2838
        %v2927 = vpack.c.b16 %v2855, %v2847
        %v2928 = vpack.c.b16 %v2856, %v2848
        %v2929 = vpack.c.b16 %v2857, %v2849
        %v2930 = vpack.c.b16 %v2858, %v2850
        %v2931 = vpack.c.b16 %v2859, %v2851
        %v2932 = vpack.c.b16 %v2860, %v2852
        %v2933 = vpack.c.b16 %v2861, %v2853
        %v2934 = vpack.c.b16 %v2862, %v2854
        %v2935 = vpack.c.b16 %v2871, %v2863
        %v2936 = vpack.c.b16 %v2872, %v2864
        %v2937 = vpack.c.b16 %v2873, %v2865
        %v2938 = vpack.c.b16 %v2874, %v2866
        %v2939 = vpack.c.b16 %v2875, %v2867
        %v2940 = vpack.c.b16 %v2876, %v2868
        %v2941 = vpack.c.b16 %v2877, %v2869
        %v2942 = vpack.c.b16 %v2878, %v2870
        %3007 = vmatprep.subr.bf16.mxu0 %v2936
        %3008 = vmatpush1.bf16.msra.mxu0 %v2935
        %3009 = vmatprep.subr.bf16.mxu0 %v2928
        %3010 = vmatpush1.bf16.msra.mxu0 %v2927
        %3011 = vmatprep.subr.bf16.mxu0 %v2920
        %3012 = vmatpush1.bf16.msra.mxu0 %v2919
        %3013 = vmatprep.subr.bf16.mxu0 %v2912
        %3014 = vmatpush1.bf16.msra.mxu0 %v2911
        %3015 = vmatprep.subr.bf16.mxu0 %v2904
        %3016 = vmatpush1.bf16.msra.mxu0 %v2903
        %3017 = vmatprep.subr.bf16.mxu0 %v2896
        %3018 = vmatpush1.bf16.msra.mxu0 %v2895
        %3019 = vmatprep.subr.bf16.mxu0 %v2888
        %3020 = vmatpush1.bf16.msra.mxu0 %v2887
        %3021 = vmatprep.subr.bf16.mxu0 %v2880
        %3022 = vmatpush1.bf16.msra.mxu0 %v2879
        %3023 = vmatprep.subr.bf16.mxu0 0
        %3024 = vmatpush2.bf16.msra.mxu0 0
        %3025 = vmatprep.subr.bf16.mxu0 0
        %3026 = vmatpush2.bf16.msra.mxu0 0
        %3027 = vmatprep.subr.bf16.mxu0 0
        %3028 = vmatpush2.bf16.msra.mxu0 0
        %3029 = vmatprep.subr.bf16.mxu0 0
        %3030 = vmatpush2.bf16.msra.mxu0 0
        %3031 = vmatprep.subr.bf16.mxu0 0
        %3032 = vmatpush2.bf16.msra.mxu0 0
        %3033 = vmatprep.subr.bf16.mxu0 0
        %3034 = vmatpush2.bf16.msra.mxu0 0
        %3035 = vmatprep.subr.bf16.mxu0 0
        %3036 = vmatpush2.bf16.msra.mxu0 0
        %3037 = vmatprep.subr.bf16.mxu0 0
        %3038 = vmatpush2.bf16.msra.mxu0 0
        %3039 = vmatprep.mubr.bf16.mxu0 0
        %3040 = vmatmul.mubr.bf16.gmra.mxu0 %v2580
        %v3041 = vpop.f32.mrf.mxu0
        %v3042 = vadd.f32 %v2650, %v3041
        %v3043 = vpop.f32.mrf.mxu0
        %v3044 = vadd.f32 %v2654, %v3043
        %v3045 = vpop.f32.mrf.mxu0
        %v3046 = vpop.f32.mrf.mxu0
        %3047 = vdwg.mxu0
        %3048 = vmatprep.subr.bf16.mxu0 %v2938
        %3049 = vmatpush1.bf16.msra.mxu0 %v2937
        %3050 = vmatprep.subr.bf16.mxu0 %v2930
        %3051 = vmatpush1.bf16.msra.mxu0 %v2929
        %3052 = vmatprep.subr.bf16.mxu0 %v2922
        %3053 = vmatpush1.bf16.msra.mxu0 %v2921
        %3054 = vmatprep.subr.bf16.mxu0 %v2914
        %3055 = vmatpush1.bf16.msra.mxu0 %v2913
        %3056 = vmatprep.subr.bf16.mxu0 %v2906
        %3057 = vmatpush1.bf16.msra.mxu0 %v2905
        %3058 = vmatprep.subr.bf16.mxu0 %v2898
        %3059 = vmatpush1.bf16.msra.mxu0 %v2897
        %3060 = vmatprep.subr.bf16.mxu0 %v2890
        %3061 = vmatpush1.bf16.msra.mxu0 %v2889
        %3062 = vmatprep.subr.bf16.mxu0 %v2882
        %3063 = vmatpush1.bf16.msra.mxu0 %v2881
        %3064 = vmatprep.subr.bf16.mxu0 0
        %3065 = vmatpush2.bf16.msra.mxu0 0
        %3066 = vmatprep.subr.bf16.mxu0 0
        %3067 = vmatpush2.bf16.msra.mxu0 0
        %3068 = vmatprep.subr.bf16.mxu0 0
        %3069 = vmatpush2.bf16.msra.mxu0 0
        %3070 = vmatprep.subr.bf16.mxu0 0
        %3071 = vmatpush2.bf16.msra.mxu0 0
        %3072 = vmatprep.subr.bf16.mxu0 0
        %3073 = vmatpush2.bf16.msra.mxu0 0
        %3074 = vmatprep.subr.bf16.mxu0 0
        %3075 = vmatpush2.bf16.msra.mxu0 0
        %3076 = vmatprep.subr.bf16.mxu0 0
        %3077 = vmatpush2.bf16.msra.mxu0 0
        %3078 = vmatprep.subr.bf16.mxu0 0
        %3079 = vmatpush2.bf16.msra.mxu0 0
        %3080 = vmatprep.mubr.bf16.mxu0 0
        %3081 = vmatmul.mubr.bf16.gmra.mxu0 %v2580
        %v3082 = vpop.f32.mrf.mxu0
        %v3083 = vadd.f32 %v2658, %v3082
        %v3084 = vpop.f32.mrf.mxu0
        %v3085 = vadd.f32 %v2662, %v3084
        %v3086 = vpop.f32.mrf.mxu0
        %v3087 = vpop.f32.mrf.mxu0
        %3088 = vdwg.mxu0
        %3089 = vmatprep.subr.bf16.mxu0 %v2940
        %3090 = vmatpush1.bf16.msra.mxu0 %v2939
        %3091 = vmatprep.subr.bf16.mxu0 %v2932
        %3092 = vmatpush1.bf16.msra.mxu0 %v2931
        %3093 = vmatprep.subr.bf16.mxu0 %v2924
        %3094 = vmatpush1.bf16.msra.mxu0 %v2923
        %3095 = vmatprep.subr.bf16.mxu0 %v2916
        %3096 = vmatpush1.bf16.msra.mxu0 %v2915
        %3097 = vmatprep.subr.bf16.mxu0 %v2908
        %3098 = vmatpush1.bf16.msra.mxu0 %v2907
        %3099 = vmatprep.subr.bf16.mxu0 %v2900
        %3100 = vmatpush1.bf16.msra.mxu0 %v2899
        %3101 = vmatprep.subr.bf16.mxu0 %v2892
        %3102 = vmatpush1.bf16.msra.mxu0 %v2891
        %3103 = vmatprep.subr.bf16.mxu0 %v2884
        %3104 = vmatpush1.bf16.msra.mxu0 %v2883
        %3105 = vmatprep.subr.bf16.mxu0 0
        %3106 = vmatpush2.bf16.msra.mxu0 0
        %3107 = vmatprep.subr.bf16.mxu0 0
        %3108 = vmatpush2.bf16.msra.mxu0 0
        %3109 = vmatprep.subr.bf16.mxu0 0
        %3110 = vmatpush2.bf16.msra.mxu0 0
        %3111 = vmatprep.subr.bf16.mxu0 0
        %3112 = vmatpush2.bf16.msra.mxu0 0
        %3113 = vmatprep.subr.bf16.mxu0 0
        %3114 = vmatpush2.bf16.msra.mxu0 0
        %3115 = vmatprep.subr.bf16.mxu0 0
        %3116 = vmatpush2.bf16.msra.mxu0 0
        %3117 = vmatprep.subr.bf16.mxu0 0
        %3118 = vmatpush2.bf16.msra.mxu0 0
        %3119 = vmatprep.subr.bf16.mxu0 0
        %3120 = vmatpush2.bf16.msra.mxu0 0
        %3121 = vmatprep.mubr.bf16.mxu0 0
        %3122 = vmatmul.mubr.bf16.gmra.mxu0 %v2580
        %v3123 = vpop.f32.mrf.mxu0
        %v3124 = vadd.f32 %v2666, %v3123
        %v3125 = vpop.f32.mrf.mxu0
        %v3126 = vadd.f32 %v2670, %v3125
        %v3127 = vpop.f32.mrf.mxu0
        %v3128 = vpop.f32.mrf.mxu0
        %3129 = vdwg.mxu0
        %3130 = vmatprep.subr.bf16.mxu0 %v2942
        %3131 = vmatpush1.bf16.msra.mxu0 %v2941
        %3132 = vmatprep.subr.bf16.mxu0 %v2934
        %3133 = vmatpush1.bf16.msra.mxu0 %v2933
        %3134 = vmatprep.subr.bf16.mxu0 %v2926
        %3135 = vmatpush1.bf16.msra.mxu0 %v2925
        %3136 = vmatprep.subr.bf16.mxu0 %v2918
        %3137 = vmatpush1.bf16.msra.mxu0 %v2917
        %3138 = vmatprep.subr.bf16.mxu0 %v2910
        %3139 = vmatpush1.bf16.msra.mxu0 %v2909
        %3140 = vmatprep.subr.bf16.mxu0 %v2902
        %3141 = vmatpush1.bf16.msra.mxu0 %v2901
        %3142 = vmatprep.subr.bf16.mxu0 %v2894
        %3143 = vmatpush1.bf16.msra.mxu0 %v2893
        %3144 = vmatprep.subr.bf16.mxu0 %v2886
        %3145 = vmatpush1.bf16.msra.mxu0 %v2885
        %3146 = vmatprep.subr.bf16.mxu0 0
        %3147 = vmatpush2.bf16.msra.mxu0 0
        %3148 = vmatprep.subr.bf16.mxu0 0
        %3149 = vmatpush2.bf16.msra.mxu0 0
        %3150 = vmatprep.subr.bf16.mxu0 0
        %3151 = vmatpush2.bf16.msra.mxu0 0
        %3152 = vmatprep.subr.bf16.mxu0 0
        %3153 = vmatpush2.bf16.msra.mxu0 0
        %3154 = vmatprep.subr.bf16.mxu0 0
        %3155 = vmatpush2.bf16.msra.mxu0 0
        %3156 = vmatprep.subr.bf16.mxu0 0
        %3157 = vmatpush2.bf16.msra.mxu0 0
        %3158 = vmatprep.subr.bf16.mxu0 0
        %3159 = vmatpush2.bf16.msra.mxu0 0
        %3160 = vmatprep.subr.bf16.mxu0 0
        %3161 = vmatpush2.bf16.msra.mxu0 0
        %3162 = vmatprep.mubr.bf16.mxu0 0
        %3163 = vmatmul.mubr.bf16.gmra.mxu0 %v2580
        %v3164 = vpop.f32.mrf.mxu0
        %v3165 = vadd.f32 %v2674, %v3164
        %v3166 = vpop.f32.mrf.mxu0
        %v3167 = vadd.f32 %v2678, %v3166
        %v3168 = vpop.f32.mrf.mxu0
        %v3169 = vpop.f32.mrf.mxu0
        %3170 = vdwg.mxu0
        %v3171 = vmax.f32 %v3042, 0.0
        %v3172 = vmax.f32 %v3044, 0.0
        %v3173 = vmax.f32 %v3083, 0.0
        %v3174 = vmax.f32 %v3085, 0.0
        %v3175 = vmax.f32 %v3124, 0.0
        %v3176 = vmax.f32 %v3126, 0.0
        %v3177 = vmax.f32 %v3165, 0.0
        %v3178 = vmax.f32 %v3167, 0.0
        %3179 = vst [vmem:[%s308] sm:$0xff] %v3171
        %3180 = vst [vmem:[%s308 + $0x8] sm:$0xff] %v3172
        %3181 = vst [vmem:[%s308 + $0x10] sm:$0xff] %v3173
        %3182 = vst [vmem:[%s308 + $0x18] sm:$0xff] %v3174
        %3183 = vst [vmem:[%s308 + $0x20] sm:$0xff] %v3175
        %3184 = vst [vmem:[%s308 + $0x28] sm:$0xff] %v3176
        %3185 = vst [vmem:[%s308 + $0x30] sm:$0xff] %v3177
        %3186 = vst [vmem:[%s308 + $0x38] sm:$0xff] %v3178
        %p3187 = scmp.lt.s32.totalorder %s20, 1
        %s3188 = scalar_select %p3187, %s20, 1
        %s3189 = smul.addr %s3188, 8
        %s3190 = smul.addr %s3189, 8
        %s3191 = scalar_lea.vmem %s7, %s3190
        // Predicated region
        $region57: #{_lambda_.1} parent=47 // pred_check
          %p3192 = pneg %p190
        $region58: #{_lambda_.1} parent=47 // pred_check_branch
          %3194 = sbr.rel (%p3192) target = $region60
        $region59: #{_lambda_.1} parent=47 // pred_region
          _
        $region60: #{_lambda_.1} parent=47 // pred_fallthru
          _
      $region48: #{_lambda_.1} parent=5 // pred_fallthru
        _
      %p3195 = scmp.le.s32.totalorder 2, %s15
      // Predicated region
      $region61: #{_lambda_.1} parent=5 // pred_check
        %p3196 = pneg %p3195
      $region62: #{_lambda_.1} parent=5 // pred_check_branch
        %3198 = sbr.rel (%p3196) target = $region64
      $region63: #{_lambda_.1} parent=5 // pred_region
        %s3199 = ssub.s32 %s15, 2
        // Predicated region
        $region65: #{_lambda_.1} parent=63 // pred_check
          %p3200 = pneg %p196
        $region66: #{_lambda_.1} parent=63 // pred_check_branch
          %3202 = sbr.rel (%p3200) target = $region68
        $region67: #{_lambda_.1} parent=63 // pred_region
          %p3203 = scmp.lt.s32.totalorder %s21, 1
          %s3204 = scalar_select %p3203, %s21, 1
          %s3205 = smul.addr %s3204, 8
          %s3206 = smul.addr %s3205, 8
          %s3207 = scalar_lea.vmem %s7, %s3206
        $region68: #{_lambda_.1} parent=63 // pred_fallthru
          _
      $region64: #{_lambda_.1} parent=5 // pred_fallthru
        _
    $region6: #{_lambda_.1} parent=1 // loop_footer
      %s19 = sadd.s32 1, %s15
    $region7: #{_lambda_.1} parent=1 // loop_footer_branch
      %14 = sbr.rel target = $region3
    $region8: #{_lambda_.1} parent=1 // loop_exit
      _
    %3208 = vsyncpa [#allocation3], 1
    %s3209 = scalar_lea.sflag [#allocation3], 1
    %3210 = vsyncpa %s3209, 1
    %3211 = vsyncpa [#allocation5], 1

</llo_original>
